<compile_context>
chip_gen: v7x
topology: tpu7x:2x2x1
jax: 0.10.0
libtpu: 0.0.40
codegen_flags: <defaults>
</compile_context>

<pallas_src>
import functools

import jax
import jax.numpy as jnp
from jax import lax
from jax.experimental import pallas as pl
from jax.experimental.pallas import tpu as pltpu


def graph_atten_kernel(x_ref, wqkv_ref, bqkv_ref, wm_ref, bm_ref,
                       w2x_ref, w2m_ref, b2_ref, y_ref,
                       *, alpha, nheads, nhid, n_nodes, group):
    """One block of `group` graphs per grid step, everything VMEM resident.

    x_ref    : [G*N, F]        bf16   (G graphs stacked along rows)
    wqkv_ref : [F, 3*H*D]      bf16   (layout: [q heads | k heads | v heads])
    bqkv_ref : [1, 3*H*D]      f32
    wm_ref   : [H*D, D]        bf16   (pre-concatenated merge weight)
    bm_ref   : [1, D]          f32
    w2x_ref  : [F, O]          bf16   (mlp2 rows hit by x)
    w2m_ref  : [D, O]          bf16   (mlp2 rows hit by m)
    b2_ref   : [1, O]          f32
    y_ref    : [G*N, O]        f32
    """
    G, N, H, D = group, n_nodes, nheads, nhid
    HD = H * D
    GN = G * N

    x = x_ref[...]                                                  # [GN, F] bf16

    # Fused QKV projection for all heads and all G graphs: one wide matmul,
    # f32 accumulate, bias + ReLU in f32, then ONE cast of the whole result.
    qkv = jnp.dot(x, wqkv_ref[...], preferred_element_type=jnp.float32)
    qkv = jnp.maximum(qkv + bqkv_ref[...], 0.0)                     # [GN, 3HD] f32
    qkv_bf = qkv.astype(jnp.bfloat16)                               # single cast
    qkv3 = qkv_bf.reshape(G, N, 3 * HD)                             # leading-dim split

    m_heads = []
    for h in range(H):                                              # static unroll
        q = qkv3[:, :, h * D:(h + 1) * D]                           # [G, N, D] bf16
        k = qkv3[:, :, HD + h * D: HD + (h + 1) * D]
        v = qkv3[:, :, 2 * HD + h * D: 2 * HD + (h + 1) * D]

        # q @ k^T batched over graphs; contract the last dims -> no transpose.
        att = lax.dot_general(q, k, (((2,), (2,)), ((0,), (0,))),
                              preferred_element_type=jnp.float32)    # [G, N, N] f32
        att = jnp.where(att > 0, att, alpha * att)                   # LeakyReLU (f32)

        m_heads.append(lax.dot_general(att.astype(jnp.bfloat16), v,
                                       (((2,), (1,)), ((0,), (0,))),
                                       preferred_element_type=jnp.float32))  # [G,N,D]

    # Fused merge: cat_h(m_h) @ W_merge in a single K = H*D matmul over all rows.
    m_cat = jnp.concatenate(m_heads, axis=-1).reshape(GN, HD)        # [GN, HD] f32
    m = jnp.dot(m_cat.astype(jnp.bfloat16), wm_ref[...],
                preferred_element_type=jnp.float32) + bm_ref[...]
    m = jnp.maximum(m, 0.0)                                          # [GN, D] f32

    # mlp2(cat([x, m], 1)) == x @ W2[:F] + m @ W2[F:] + b2  (no lane-concat).
    y = (jnp.dot(x, w2x_ref[...], preferred_element_type=jnp.float32)
         + jnp.dot(m.astype(jnp.bfloat16), w2m_ref[...],
                   preferred_element_type=jnp.float32)
         + b2_ref[...])
    y_ref[...] = y.astype(y_ref.dtype)


def pack_params(params, *, nheads, nhid):
    """Repack per-head params into fused, MXU-friendly (bf16) operands."""
    (wq, bq, wk, bk, wv, bv, wm, bm, w2, b2) = params
    nfeat = wq.shape[1]

    def flat_w(w):   # [H, F, D] -> [F, H*D]
        return jnp.transpose(w, (1, 0, 2)).reshape(nfeat, nheads * nhid)

    def flat_b(b):   # [H, 1, D] -> [1, H*D]
        return jnp.transpose(b, (1, 0, 2)).reshape(1, nheads * nhid)

    wqkv = jnp.concatenate([flat_w(wq), flat_w(wk), flat_w(wv)], axis=1)  # [F, 3HD]
    bqkv = jnp.concatenate([flat_b(bq), flat_b(bk), flat_b(bv)], axis=1)  # [1, 3HD]
    w_merge = wm.reshape(nheads * nhid, nhid)                             # [HD, D]
    w2x = w2[:nfeat]                                                      # [F, O]
    w2m = w2[nfeat:]                                                      # [D, O]

    return (wqkv.astype(jnp.bfloat16), bqkv.astype(jnp.float32),
            w_merge.astype(jnp.bfloat16), bm.astype(jnp.float32),
            w2x.astype(jnp.bfloat16), w2m.astype(jnp.bfloat16),
            b2.astype(jnp.float32))


def choose_group(batch, n_nodes, target_rows=256):
    """Largest divisor G of `batch` with G*n_nodes <= ~target MXU rows and
    a sublane-aligned (multiple-of-8) row count (or the full batch)."""
    best = 1
    for g in range(1, batch + 1):
        if batch % g != 0:
            continue
        rows = g * n_nodes
        if rows <= max(target_rows, n_nodes) and (rows % 8 == 0 or g == batch):
            best = g
    return best


def graph_atten_forward(x, params, *, alpha, nheads, nhid):
    """x: [B, N, F] float32 -- B independent graphs, G per grid step."""
    B, N, F = x.shape
    wqkv, bqkv, wm, bm, w2x, w2m, b2 = pack_params(params, nheads=nheads, nhid=nhid)
    nout = b2.shape[1]
    HD = nheads * nhid

    G = choose_group(B, N)
    num_blocks = B // G
    GN = G * N

    x2d = x.reshape(B * N, F).astype(jnp.bfloat16)
    kernel = functools.partial(graph_atten_kernel, alpha=alpha, nheads=nheads,
                               nhid=nhid, n_nodes=N, group=G)

    def full(a):  # weights: same (whole-array) block every grid step
        return pl.BlockSpec(a.shape, lambda b, _nd=a.ndim: (0,) * _nd)

    flops = B * (2 * N * F * 3 * HD                      # qkv projection
                 + nheads * 4 * N * N * nhid             # q@k^T and att@v
                 + 2 * N * HD * nhid                     # merge
                 + 2 * N * (F + nhid) * nout)            # mlp2
    bytes_accessed = (x2d.size * 2 + B * N * nout * 4
                      + wqkv.size * 2 + bqkv.size * 4 + wm.size * 2 + bm.size * 4
                      + w2x.size * 2 + w2m.size * 2 + b2.size * 4)

    grid_spec = pltpu.PrefetchScalarGridSpec(
        num_scalar_prefetch=0,
        grid=(num_blocks,),
        in_specs=[pl.BlockSpec((GN, F), lambda b: (b, 0)),
                  full(wqkv), full(bqkv), full(wm), full(bm),
                  full(w2x), full(w2m), full(b2)],
        out_specs=pl.BlockSpec((GN, nout), lambda b: (b, 0)),
    )

    y2d = pl.pallas_call(
        kernel,
        out_shape=jax.ShapeDtypeStruct((B * N, nout), jnp.float32),
        grid_spec=grid_spec,
        compiler_params=pltpu.CompilerParams(
            dimension_semantics=("parallel",)),
        cost_estimate=pl.CostEstimate(flops=flops, transcendentals=0,
                                      bytes_accessed=bytes_accessed),
    )(x2d, wqkv, bqkv, wm, bm, w2x, w2m, b2)
    return y2d.reshape(B, N, nout)


def graph_atten_reference(x, params, *, alpha, nheads):
    """Pure-JAX f32 reference mirroring the PyTorch forward for ONE graph."""
    (wq, bq, wk, bk, wv, bv, wm, bm, w2, b2) = params
    heads = []
    for h in range(nheads):
        q = jax.nn.relu(x @ wq[h] + bq[h])
        k = jax.nn.relu(x @ wk[h] + bk[h])
        v = jax.nn.relu(x @ wv[h] + bv[h])
        att = q @ k.T
        att = jnp.where(att > 0, att, alpha * att)
        heads.append(att @ v)
    m_cat = jnp.concatenate(heads, axis=1)                    # [N, H*D]
    w_merge = wm.reshape(-1, wm.shape[2])                     # [H*D, D]
    m = jax.nn.relu(m_cat @ w_merge + bm)
    xc = jnp.concatenate([x, m], axis=1)                      # [N, F+D]
    return xc @ w2 + b2


def init_params(key, nfeat, nhid, nout, nheads):
    ks = jax.random.split(key, 10)

    def uni(k, shape, fan_in):
        bound = 1.0 / jnp.sqrt(jnp.float32(fan_in))
        return jax.random.uniform(k, shape, jnp.float32, -bound, bound)

    # per-head q/k/v linears, stored as [in, out] and stacked over heads
    wq = uni(ks[0], (nheads, nfeat, nhid), nfeat)
    bq = uni(ks[1], (nheads, 1, nhid), nfeat)
    wk = uni(ks[2], (nheads, nfeat, nhid), nfeat)
    bk = uni(ks[3], (nheads, 1, nhid), nfeat)
    wv = uni(ks[4], (nheads, nfeat, nhid), nfeat)
    bv = uni(ks[5], (nheads, 1, nhid), nfeat)
    # merge: Linear(nheads*nhid -> nhid), weight split per head: [H, nhid, nhid]
    wm = uni(ks[6], (nheads, nhid, nhid), nheads * nhid)
    bm = uni(ks[7], (1, nhid), nheads * nhid)
    # mlp2: Linear(nfeat+nhid -> nout), stored whole as [F+D, O]
    w2 = uni(ks[8], (nfeat + nhid, nout), nfeat + nhid)
    b2 = uni(ks[9], (1, nout), nfeat + nhid)
    return (wq, bq, wk, bk, wv, bv, wm, bm, w2, b2)


if __name__ == "__main__":
    B, N, NFEAT, NHID, NOUT, NHEADS, ALPHA = 2, 16, 32, 32, 16, 8, 0.2

    key = jax.random.PRNGKey(0)
    kx, kp = jax.random.split(key)
    x = jax.random.normal(kx, (B, N, NFEAT), jnp.float32)
    params = init_params(kp, NFEAT, NHID, NOUT, NHEADS)

    y = graph_atten_forward(x, params, alpha=ALPHA, nheads=NHEADS, nhid=NHID)
    y = jax.block_until_ready(y)

    y_ref = jnp.stack([graph_atten_reference(x[b], params, alpha=ALPHA, nheads=NHEADS)
                       for b in range(B)])

    assert y.shape == (B, N, NOUT)
    # bf16 MXU operands with f32 accumulation: compare against the f32 reference
    # with a mixed-precision tolerance (relative to the output scale).
    scale = jnp.max(jnp.abs(y_ref))
    max_err = jnp.max(jnp.abs(y - y_ref))
    assert max_err <= 5e-2 * scale + 1e-3, (float(max_err), float(scale))

    # TODO(synk): if N grows to thousands of nodes, the per-graph [N, N] attention
    # matrix must be streamed flash-style (grid over q/k tiles) instead of being
    # materialized, and G must be re-budgeted against v7x's 64 MiB VMEM.
    print("KERNEL_OK")
</pallas_src>

<mosaic_0001>
module attributes {stable_mosaic.version = 11 : i64} {
  func.func @graph_atten_kernel(%arg0: i32, %arg1: memref<32x32xbf16, #tpu.memory_space<vmem>>, %arg2: memref<32x768xbf16, #tpu.memory_space<vmem>>, %arg3: memref<1x768xf32, #tpu.memory_space<vmem>>, %arg4: memref<256x32xbf16, #tpu.memory_space<vmem>>, %arg5: memref<1x32xf32, #tpu.memory_space<vmem>>, %arg6: memref<32x16xbf16, #tpu.memory_space<vmem>>, %arg7: memref<32x16xbf16, #tpu.memory_space<vmem>>, %arg8: memref<1x16xf32, #tpu.memory_space<vmem>>, %arg9: memref<32x16xf32, #tpu.memory_space<vmem>>) attributes {dimension_semantics = [#tpu.dimension_semantics<parallel>], iteration_bounds = array<i64: 1>, scalar_prefetch = 0 : i64, scratch_operands = 0 : i64, tpu.core_type = #tpu.core_type<tc>, window_params = [{transform_indices = @transform_0, window_bounds = array<i64: 32, 32>}, {pipeline_mode = #tpu.pipeline_mode<synchronous>, transform_indices = @transform_1, window_bounds = array<i64: 32, 768>}, {pipeline_mode = #tpu.pipeline_mode<synchronous>, transform_indices = @transform_2, window_bounds = array<i64: 1, 768>}, {pipeline_mode = #tpu.pipeline_mode<synchronous>, transform_indices = @transform_3, window_bounds = array<i64: 256, 32>}, {pipeline_mode = #tpu.pipeline_mode<synchronous>, transform_indices = @transform_4, window_bounds = array<i64: 1, 32>}, {pipeline_mode = #tpu.pipeline_mode<synchronous>, transform_indices = @transform_5, window_bounds = array<i64: 32, 16>}, {pipeline_mode = #tpu.pipeline_mode<synchronous>, transform_indices = @transform_6, window_bounds = array<i64: 32, 16>}, {pipeline_mode = #tpu.pipeline_mode<synchronous>, transform_indices = @transform_7, window_bounds = array<i64: 1, 16>}, {transform_indices = @transform_8, window_bounds = array<i64: 32, 16>}]} {
    %c0 = arith.constant 0 : index
    %c0_0 = arith.constant 0 : index
    %0 = vector.load %arg1[%c0, %c0_0] : memref<32x32xbf16, #tpu.memory_space<vmem>>, vector<32x32xbf16>
    %c0_1 = arith.constant 0 : index
    %c0_2 = arith.constant 0 : index
    %1 = vector.load %arg2[%c0_1, %c0_2] : memref<32x768xbf16, #tpu.memory_space<vmem>>, vector<32x768xbf16>
    %cst = arith.constant dense<0.000000e+00> : vector<32x768xf32>
    %2 = tpu.matmul %0, %1, %cst {dimension_numbers = #tpu.dot_dimension_numbers<[1], [0], [0], [1], [0, 0, 1, 1], [], []>} : vector<32x32xbf16>, vector<32x768xbf16>, vector<32x768xf32> -> vector<32x768xf32>
    %c0_3 = arith.constant 0 : index
    %c0_4 = arith.constant 0 : index
    %3 = vector.load %arg3[%c0_3, %c0_4] : memref<1x768xf32, #tpu.memory_space<vmem>>, vector<1x768xf32>
    %4 = vector.broadcast %3 : vector<1x768xf32> to vector<32x768xf32>
    %5 = arith.addf %2, %4 : vector<32x768xf32>
    %cst_5 = arith.constant 0.000000e+00 : f32
    %6 = vector.broadcast %cst_5 : f32 to vector<32x768xf32>
    %7 = arith.maximumf %5, %6 : vector<32x768xf32>
    %8 = arith.truncf %7 : vector<32x768xf32> to vector<32x768xbf16>
    %9 = vector.shape_cast %8 : vector<32x768xbf16> to vector<2x16x768xbf16>
    %10 = vector.extract_strided_slice %9 {offsets = [0, 0, 0], sizes = [2, 16, 32], strides = [1, 1, 1]} : vector<2x16x768xbf16> to vector<2x16x32xbf16>
    %11 = vector.extract_strided_slice %9 {offsets = [0, 0, 256], sizes = [2, 16, 32], strides = [1, 1, 1]} : vector<2x16x768xbf16> to vector<2x16x32xbf16>
    %12 = vector.extract_strided_slice %9 {offsets = [0, 0, 512], sizes = [2, 16, 32], strides = [1, 1, 1]} : vector<2x16x768xbf16> to vector<2x16x32xbf16>
    %cst_6 = arith.constant dense<0.000000e+00> : vector<2x16x16xf32>
    %13 = tpu.matmul %10, %11, %cst_6 {dimension_numbers = #tpu.dot_dimension_numbers<[2], [2], [1], [1], [0, 0, 0, 1, 1, 1], [0], [0]>} : vector<2x16x32xbf16>, vector<2x16x32xbf16>, vector<2x16x16xf32> -> vector<2x16x16xf32>
    %cst_7 = arith.constant 0.000000e+00 : f32
    %14 = vector.broadcast %cst_7 : f32 to vector<2x16x16xf32>
    %15 = arith.cmpf ogt, %13, %14 : vector<2x16x16xf32>
    %cst_8 = arith.constant 2.000000e-01 : f32
    %16 = vector.broadcast %cst_8 : f32 to vector<2x16x16xf32>
    %17 = arith.mulf %16, %13 : vector<2x16x16xf32>
    %18 = arith.select %15, %13, %17 : vector<2x16x16xi1>, vector<2x16x16xf32>
    %19 = arith.truncf %18 : vector<2x16x16xf32> to vector<2x16x16xbf16>
    %cst_9 = arith.constant dense<0.000000e+00> : vector<2x16x32xf32>
    %20 = tpu.matmul %19, %12, %cst_9 {dimension_numbers = #tpu.dot_dimension_numbers<[2], [1], [1], [2], [0, 0, 0, 1, 1, 2], [0], [0]>} : vector<2x16x16xbf16>, vector<2x16x32xbf16>, vector<2x16x32xf32> -> vector<2x16x32xf32>
    %21 = vector.extract_strided_slice %9 {offsets = [0, 0, 32], sizes = [2, 16, 32], strides = [1, 1, 1]} : vector<2x16x768xbf16> to vector<2x16x32xbf16>
    %22 = vector.extract_strided_slice %9 {offsets = [0, 0, 288], sizes = [2, 16, 32], strides = [1, 1, 1]} : vector<2x16x768xbf16> to vector<2x16x32xbf16>
    %23 = vector.extract_strided_slice %9 {offsets = [0, 0, 544], sizes = [2, 16, 32], strides = [1, 1, 1]} : vector<2x16x768xbf16> to vector<2x16x32xbf16>
    %cst_10 = arith.constant dense<0.000000e+00> : vector<2x16x16xf32>
    %24 = tpu.matmul %21, %22, %cst_10 {dimension_numbers = #tpu.dot_dimension_numbers<[2], [2], [1], [1], [0, 0, 0, 1, 1, 1], [0], [0]>} : vector<2x16x32xbf16>, vector<2x16x32xbf16>, vector<2x16x16xf32> -> vector<2x16x16xf32>
    %cst_11 = arith.constant 0.000000e+00 : f32
    %25 = vector.broadcast %cst_11 : f32 to vector<2x16x16xf32>
    %26 = arith.cmpf ogt, %24, %25 : vector<2x16x16xf32>
    %cst_12 = arith.constant 2.000000e-01 : f32
    %27 = vector.broadcast %cst_12 : f32 to vector<2x16x16xf32>
    %28 = arith.mulf %27, %24 : vector<2x16x16xf32>
    %29 = arith.select %26, %24, %28 : vector<2x16x16xi1>, vector<2x16x16xf32>
    %30 = arith.truncf %29 : vector<2x16x16xf32> to vector<2x16x16xbf16>
    %cst_13 = arith.constant dense<0.000000e+00> : vector<2x16x32xf32>
    %31 = tpu.matmul %30, %23, %cst_13 {dimension_numbers = #tpu.dot_dimension_numbers<[2], [1], [1], [2], [0, 0, 0, 1, 1, 2], [0], [0]>} : vector<2x16x16xbf16>, vector<2x16x32xbf16>, vector<2x16x32xf32> -> vector<2x16x32xf32>
    %32 = vector.extract_strided_slice %9 {offsets = [0, 0, 64], sizes = [2, 16, 32], strides = [1, 1, 1]} : vector<2x16x768xbf16> to vector<2x16x32xbf16>
    %33 = vector.extract_strided_slice %9 {offsets = [0, 0, 320], sizes = [2, 16, 32], strides = [1, 1, 1]} : vector<2x16x768xbf16> to vector<2x16x32xbf16>
    %34 = vector.extract_strided_slice %9 {offsets = [0, 0, 576], sizes = [2, 16, 32], strides = [1, 1, 1]} : vector<2x16x768xbf16> to vector<2x16x32xbf16>
    %cst_14 = arith.constant dense<0.000000e+00> : vector<2x16x16xf32>
    %35 = tpu.matmul %32, %33, %cst_14 {dimension_numbers = #tpu.dot_dimension_numbers<[2], [2], [1], [1], [0, 0, 0, 1, 1, 1], [0], [0]>} : vector<2x16x32xbf16>, vector<2x16x32xbf16>, vector<2x16x16xf32> -> vector<2x16x16xf32>
    %cst_15 = arith.constant 0.000000e+00 : f32
    %36 = vector.broadcast %cst_15 : f32 to vector<2x16x16xf32>
    %37 = arith.cmpf ogt, %35, %36 : vector<2x16x16xf32>
    %cst_16 = arith.constant 2.000000e-01 : f32
    %38 = vector.broadcast %cst_16 : f32 to vector<2x16x16xf32>
    %39 = arith.mulf %38, %35 : vector<2x16x16xf32>
    %40 = arith.select %37, %35, %39 : vector<2x16x16xi1>, vector<2x16x16xf32>
    %41 = arith.truncf %40 : vector<2x16x16xf32> to vector<2x16x16xbf16>
    %cst_17 = arith.constant dense<0.000000e+00> : vector<2x16x32xf32>
    %42 = tpu.matmul %41, %34, %cst_17 {dimension_numbers = #tpu.dot_dimension_numbers<[2], [1], [1], [2], [0, 0, 0, 1, 1, 2], [0], [0]>} : vector<2x16x16xbf16>, vector<2x16x32xbf16>, vector<2x16x32xf32> -> vector<2x16x32xf32>
    %43 = vector.extract_strided_slice %9 {offsets = [0, 0, 96], sizes = [2, 16, 32], strides = [1, 1, 1]} : vector<2x16x768xbf16> to vector<2x16x32xbf16>
    %44 = vector.extract_strided_slice %9 {offsets = [0, 0, 352], sizes = [2, 16, 32], strides = [1, 1, 1]} : vector<2x16x768xbf16> to vector<2x16x32xbf16>
    %45 = vector.extract_strided_slice %9 {offsets = [0, 0, 608], sizes = [2, 16, 32], strides = [1, 1, 1]} : vector<2x16x768xbf16> to vector<2x16x32xbf16>
    %cst_18 = arith.constant dense<0.000000e+00> : vector<2x16x16xf32>
    %46 = tpu.matmul %43, %44, %cst_18 {dimension_numbers = #tpu.dot_dimension_numbers<[2], [2], [1], [1], [0, 0, 0, 1, 1, 1], [0], [0]>} : vector<2x16x32xbf16>, vector<2x16x32xbf16>, vector<2x16x16xf32> -> vector<2x16x16xf32>
    %cst_19 = arith.constant 0.000000e+00 : f32
    %47 = vector.broadcast %cst_19 : f32 to vector<2x16x16xf32>
    %48 = arith.cmpf ogt, %46, %47 : vector<2x16x16xf32>
    %cst_20 = arith.constant 2.000000e-01 : f32
    %49 = vector.broadcast %cst_20 : f32 to vector<2x16x16xf32>
    %50 = arith.mulf %49, %46 : vector<2x16x16xf32>
    %51 = arith.select %48, %46, %50 : vector<2x16x16xi1>, vector<2x16x16xf32>
    %52 = arith.truncf %51 : vector<2x16x16xf32> to vector<2x16x16xbf16>
    %cst_21 = arith.constant dense<0.000000e+00> : vector<2x16x32xf32>
    %53 = tpu.matmul %52, %45, %cst_21 {dimension_numbers = #tpu.dot_dimension_numbers<[2], [1], [1], [2], [0, 0, 0, 1, 1, 2], [0], [0]>} : vector<2x16x16xbf16>, vector<2x16x32xbf16>, vector<2x16x32xf32> -> vector<2x16x32xf32>
    %54 = vector.extract_strided_slice %9 {offsets = [0, 0, 128], sizes = [2, 16, 32], strides = [1, 1, 1]} : vector<2x16x768xbf16> to vector<2x16x32xbf16>
    %55 = vector.extract_strided_slice %9 {offsets = [0, 0, 384], sizes = [2, 16, 32], strides = [1, 1, 1]} : vector<2x16x768xbf16> to vector<2x16x32xbf16>
    %56 = vector.extract_strided_slice %9 {offsets = [0, 0, 640], sizes = [2, 16, 32], strides = [1, 1, 1]} : vector<2x16x768xbf16> to vector<2x16x32xbf16>
    %cst_22 = arith.constant dense<0.000000e+00> : vector<2x16x16xf32>
    %57 = tpu.matmul %54, %55, %cst_22 {dimension_numbers = #tpu.dot_dimension_numbers<[2], [2], [1], [1], [0, 0, 0, 1, 1, 1], [0], [0]>} : vector<2x16x32xbf16>, vector<2x16x32xbf16>, vector<2x16x16xf32> -> vector<2x16x16xf32>
    %cst_23 = arith.constant 0.000000e+00 : f32
    %58 = vector.broadcast %cst_23 : f32 to vector<2x16x16xf32>
    %59 = arith.cmpf ogt, %57, %58 : vector<2x16x16xf32>
    %cst_24 = arith.constant 2.000000e-01 : f32
    %60 = vector.broadcast %cst_24 : f32 to vector<2x16x16xf32>
    %61 = arith.mulf %60, %57 : vector<2x16x16xf32>
    %62 = arith.select %59, %57, %61 : vector<2x16x16xi1>, vector<2x16x16xf32>
    %63 = arith.truncf %62 : vector<2x16x16xf32> to vector<2x16x16xbf16>
    %cst_25 = arith.constant dense<0.000000e+00> : vector<2x16x32xf32>
    %64 = tpu.matmul %63, %56, %cst_25 {dimension_numbers = #tpu.dot_dimension_numbers<[2], [1], [1], [2], [0, 0, 0, 1, 1, 2], [0], [0]>} : vector<2x16x16xbf16>, vector<2x16x32xbf16>, vector<2x16x32xf32> -> vector<2x16x32xf32>
    %65 = vector.extract_strided_slice %9 {offsets = [0, 0, 160], sizes = [2, 16, 32], strides = [1, 1, 1]} : vector<2x16x768xbf16> to vector<2x16x32xbf16>
    %66 = vector.extract_strided_slice %9 {offsets = [0, 0, 416], sizes = [2, 16, 32], strides = [1, 1, 1]} : vector<2x16x768xbf16> to vector<2x16x32xbf16>
    %67 = vector.extract_strided_slice %9 {offsets = [0, 0, 672], sizes = [2, 16, 32], strides = [1, 1, 1]} : vector<2x16x768xbf16> to vector<2x16x32xbf16>
    %cst_26 = arith.constant dense<0.000000e+00> : vector<2x16x16xf32>
    %68 = tpu.matmul %65, %66, %cst_26 {dimension_numbers = #tpu.dot_dimension_numbers<[2], [2], [1], [1], [0, 0, 0, 1, 1, 1], [0], [0]>} : vector<2x16x32xbf16>, vector<2x16x32xbf16>, vector<2x16x16xf32> -> vector<2x16x16xf32>
    %cst_27 = arith.constant 0.000000e+00 : f32
    %69 = vector.broadcast %cst_27 : f32 to vector<2x16x16xf32>
    %70 = arith.cmpf ogt, %68, %69 : vector<2x16x16xf32>
    %cst_28 = arith.constant 2.000000e-01 : f32
    %71 = vector.broadcast %cst_28 : f32 to vector<2x16x16xf32>
    %72 = arith.mulf %71, %68 : vector<2x16x16xf32>
    %73 = arith.select %70, %68, %72 : vector<2x16x16xi1>, vector<2x16x16xf32>
    %74 = arith.truncf %73 : vector<2x16x16xf32> to vector<2x16x16xbf16>
    %cst_29 = arith.constant dense<0.000000e+00> : vector<2x16x32xf32>
    %75 = tpu.matmul %74, %67, %cst_29 {dimension_numbers = #tpu.dot_dimension_numbers<[2], [1], [1], [2], [0, 0, 0, 1, 1, 2], [0], [0]>} : vector<2x16x16xbf16>, vector<2x16x32xbf16>, vector<2x16x32xf32> -> vector<2x16x32xf32>
    %76 = vector.extract_strided_slice %9 {offsets = [0, 0, 192], sizes = [2, 16, 32], strides = [1, 1, 1]} : vector<2x16x768xbf16> to vector<2x16x32xbf16>
    %77 = vector.extract_strided_slice %9 {offsets = [0, 0, 448], sizes = [2, 16, 32], strides = [1, 1, 1]} : vector<2x16x768xbf16> to vector<2x16x32xbf16>
    %78 = vector.extract_strided_slice %9 {offsets = [0, 0, 704], sizes = [2, 16, 32], strides = [1, 1, 1]} : vector<2x16x768xbf16> to vector<2x16x32xbf16>
    %cst_30 = arith.constant dense<0.000000e+00> : vector<2x16x16xf32>
    %79 = tpu.matmul %76, %77, %cst_30 {dimension_numbers = #tpu.dot_dimension_numbers<[2], [2], [1], [1], [0, 0, 0, 1, 1, 1], [0], [0]>} : vector<2x16x32xbf16>, vector<2x16x32xbf16>, vector<2x16x16xf32> -> vector<2x16x16xf32>
    %cst_31 = arith.constant 0.000000e+00 : f32
    %80 = vector.broadcast %cst_31 : f32 to vector<2x16x16xf32>
    %81 = arith.cmpf ogt, %79, %80 : vector<2x16x16xf32>
    %cst_32 = arith.constant 2.000000e-01 : f32
    %82 = vector.broadcast %cst_32 : f32 to vector<2x16x16xf32>
    %83 = arith.mulf %82, %79 : vector<2x16x16xf32>
    %84 = arith.select %81, %79, %83 : vector<2x16x16xi1>, vector<2x16x16xf32>
    %85 = arith.truncf %84 : vector<2x16x16xf32> to vector<2x16x16xbf16>
    %cst_33 = arith.constant dense<0.000000e+00> : vector<2x16x32xf32>
    %86 = tpu.matmul %85, %78, %cst_33 {dimension_numbers = #tpu.dot_dimension_numbers<[2], [1], [1], [2], [0, 0, 0, 1, 1, 2], [0], [0]>} : vector<2x16x16xbf16>, vector<2x16x32xbf16>, vector<2x16x32xf32> -> vector<2x16x32xf32>
    %87 = vector.extract_strided_slice %9 {offsets = [0, 0, 224], sizes = [2, 16, 32], strides = [1, 1, 1]} : vector<2x16x768xbf16> to vector<2x16x32xbf16>
    %88 = vector.extract_strided_slice %9 {offsets = [0, 0, 480], sizes = [2, 16, 32], strides = [1, 1, 1]} : vector<2x16x768xbf16> to vector<2x16x32xbf16>
    %89 = vector.extract_strided_slice %9 {offsets = [0, 0, 736], sizes = [2, 16, 32], strides = [1, 1, 1]} : vector<2x16x768xbf16> to vector<2x16x32xbf16>
    %cst_34 = arith.constant dense<0.000000e+00> : vector<2x16x16xf32>
    %90 = tpu.matmul %87, %88, %cst_34 {dimension_numbers = #tpu.dot_dimension_numbers<[2], [2], [1], [1], [0, 0, 0, 1, 1, 1], [0], [0]>} : vector<2x16x32xbf16>, vector<2x16x32xbf16>, vector<2x16x16xf32> -> vector<2x16x16xf32>
    %cst_35 = arith.constant 0.000000e+00 : f32
    %91 = vector.broadcast %cst_35 : f32 to vector<2x16x16xf32>
    %92 = arith.cmpf ogt, %90, %91 : vector<2x16x16xf32>
    %cst_36 = arith.constant 2.000000e-01 : f32
    %93 = vector.broadcast %cst_36 : f32 to vector<2x16x16xf32>
    %94 = arith.mulf %93, %90 : vector<2x16x16xf32>
    %95 = arith.select %92, %90, %94 : vector<2x16x16xi1>, vector<2x16x16xf32>
    %96 = arith.truncf %95 : vector<2x16x16xf32> to vector<2x16x16xbf16>
    %cst_37 = arith.constant dense<0.000000e+00> : vector<2x16x32xf32>
    %97 = tpu.matmul %96, %89, %cst_37 {dimension_numbers = #tpu.dot_dimension_numbers<[2], [1], [1], [2], [0, 0, 0, 1, 1, 2], [0], [0]>} : vector<2x16x16xbf16>, vector<2x16x32xbf16>, vector<2x16x32xf32> -> vector<2x16x32xf32>
    %98 = tpu.concatenate %20, %31, %42, %53, %64, %75, %86, %97 in 2 : vector<2x16x32xf32>, vector<2x16x32xf32>, vector<2x16x32xf32>, vector<2x16x32xf32>, vector<2x16x32xf32>, vector<2x16x32xf32>, vector<2x16x32xf32>, vector<2x16x32xf32> -> vector<2x16x256xf32>
    %99 = vector.shape_cast %98 : vector<2x16x256xf32> to vector<32x256xf32>
    %100 = arith.truncf %99 : vector<32x256xf32> to vector<32x256xbf16>
    %c0_38 = arith.constant 0 : index
    %c0_39 = arith.constant 0 : index
    %101 = vector.load %arg4[%c0_38, %c0_39] : memref<256x32xbf16, #tpu.memory_space<vmem>>, vector<256x32xbf16>
    %cst_40 = arith.constant dense<0.000000e+00> : vector<32x32xf32>
    %102 = tpu.matmul %100, %101, %cst_40 {dimension_numbers = #tpu.dot_dimension_numbers<[1], [0], [0], [1], [0, 0, 1, 1], [], []>} : vector<32x256xbf16>, vector<256x32xbf16>, vector<32x32xf32> -> vector<32x32xf32>
    %c0_41 = arith.constant 0 : index
    %c0_42 = arith.constant 0 : index
    %103 = vector.load %arg5[%c0_41, %c0_42] : memref<1x32xf32, #tpu.memory_space<vmem>>, vector<1x32xf32>
    %104 = vector.broadcast %103 : vector<1x32xf32> to vector<32x32xf32>
    %105 = arith.addf %102, %104 : vector<32x32xf32>
    %cst_43 = arith.constant 0.000000e+00 : f32
    %106 = vector.broadcast %cst_43 : f32 to vector<32x32xf32>
    %107 = arith.maximumf %105, %106 : vector<32x32xf32>
    %c0_44 = arith.constant 0 : index
    %c0_45 = arith.constant 0 : index
    %108 = vector.load %arg6[%c0_44, %c0_45] : memref<32x16xbf16, #tpu.memory_space<vmem>>, vector<32x16xbf16>
    %cst_46 = arith.constant dense<0.000000e+00> : vector<32x16xf32>
    %109 = tpu.matmul %0, %108, %cst_46 {dimension_numbers = #tpu.dot_dimension_numbers<[1], [0], [0], [1], [0, 0, 1, 1], [], []>} : vector<32x32xbf16>, vector<32x16xbf16>, vector<32x16xf32> -> vector<32x16xf32>
    %110 = arith.truncf %107 : vector<32x32xf32> to vector<32x32xbf16>
    %c0_47 = arith.constant 0 : index
    %c0_48 = arith.constant 0 : index
    %111 = vector.load %arg7[%c0_47, %c0_48] : memref<32x16xbf16, #tpu.memory_space<vmem>>, vector<32x16xbf16>
    %cst_49 = arith.constant dense<0.000000e+00> : vector<32x16xf32>
    %112 = tpu.matmul %110, %111, %cst_49 {dimension_numbers = #tpu.dot_dimension_numbers<[1], [0], [0], [1], [0, 0, 1, 1], [], []>} : vector<32x32xbf16>, vector<32x16xbf16>, vector<32x16xf32> -> vector<32x16xf32>
    %113 = arith.addf %109, %112 : vector<32x16xf32>
    %c0_50 = arith.constant 0 : index
    %c0_51 = arith.constant 0 : index
    %114 = vector.load %arg8[%c0_50, %c0_51] : memref<1x16xf32, #tpu.memory_space<vmem>>, vector<1x16xf32>
    %115 = vector.broadcast %114 : vector<1x16xf32> to vector<32x16xf32>
    %116 = arith.addf %113, %115 : vector<32x16xf32>
    %c0_52 = arith.constant 0 : index
    %c0_53 = arith.constant 0 : index
    %117 = vector.load %arg9[%c0_52, %c0_53] : memref<32x16xf32, #tpu.memory_space<vmem>>, vector<32x16xf32>
    tpu.vector_store %arg9[%c0_52, %c0_53], %116 {strides = array<i32>} : memref<32x16xf32, #tpu.memory_space<vmem>>, vector<32x16xf32>,
    return
  }
  func.func @transform_0(%arg0: i32) -> (i32, i32) {
    %c0_i32 = arith.constant 0 : i32
    %c0_i32_0 = arith.constant 0 : i32
    return %arg0, %c0_i32 : i32, i32
  }
  func.func @transform_1(%arg0: i32) -> (i32, i32) {
    %c0_i32 = arith.constant 0 : i32
    %c0_i32_0 = arith.constant 0 : i32
    %c0_i32_1 = arith.constant 0 : i32
    return %c0_i32, %c0_i32_0 : i32, i32
  }
  func.func @transform_2(%arg0: i32) -> (i32, i32) {
    %c0_i32 = arith.constant 0 : i32
    %c0_i32_0 = arith.constant 0 : i32
    %c0_i32_1 = arith.constant 0 : i32
    return %c0_i32, %c0_i32_0 : i32, i32
  }
  func.func @transform_3(%arg0: i32) -> (i32, i32) {
    %c0_i32 = arith.constant 0 : i32
    %c0_i32_0 = arith.constant 0 : i32
    %c0_i32_1 = arith.constant 0 : i32
    return %c0_i32, %c0_i32_0 : i32, i32
  }
  func.func @transform_4(%arg0: i32) -> (i32, i32) {
    %c0_i32 = arith.constant 0 : i32
    %c0_i32_0 = arith.constant 0 : i32
    %c0_i32_1 = arith.constant 0 : i32
    return %c0_i32, %c0_i32_0 : i32, i32
  }
  func.func @transform_5(%arg0: i32) -> (i32, i32) {
    %c0_i32 = arith.constant 0 : i32
    %c0_i32_0 = arith.constant 0 : i32
    %c0_i32_1 = arith.constant 0 : i32
    return %c0_i32, %c0_i32_0 : i32, i32
  }
  func.func @transform_6(%arg0: i32) -> (i32, i32) {
    %c0_i32 = arith.constant 0 : i32
    %c0_i32_0 = arith.constant 0 : i32
    %c0_i32_1 = arith.constant 0 : i32
    return %c0_i32, %c0_i32_0 : i32, i32
  }
  func.func @transform_7(%arg0: i32) -> (i32, i32) {
    %c0_i32 = arith.constant 0 : i32
    %c0_i32_0 = arith.constant 0 : i32
    %c0_i32_1 = arith.constant 0 : i32
    return %c0_i32, %c0_i32_0 : i32, i32
  }
  func.func @transform_8(%arg0: i32) -> (i32, i32) {
    %c0_i32 = arith.constant 0 : i32
    %c0_i32_0 = arith.constant 0 : i32
    return %arg0, %c0_i32 : i32, i32
  }
}

</mosaic_0001>

<llo_original>
// kernel: tpu_custom_call.1
$region0: #{tpu_custom_call.1}
  #allocation0 [shape = 'u32[]', space=smem, size = 0x4, offset = 0x4, fixed_abs, tag = 'smem constant byte address 0x4 - core index']
  #allocation1 [shape = 'u32[144,128]{1,0:T(1,128)}', space=vmem, size = 0x12000, scoped, tag = 'internal scratch']
  %s0 = inlined_call_operand.vmem [shape: bf16[32,32], index: 0, kind: input, shape index: {}]
  %s1 = inlined_call_operand.vmem [shape: bf16[32,768], index: 1, kind: input, shape index: {}]
  %s2 = inlined_call_operand.vmem [shape: f32[1,768], index: 2, kind: input, shape index: {}]
  %s3 = inlined_call_operand.vmem [shape: bf16[256,32], index: 3, kind: input, shape index: {}]
  %s4 = inlined_call_operand.vmem [shape: f32[1,32], index: 4, kind: input, shape index: {}]
  %s5 = inlined_call_operand.vmem [shape: bf16[32,16], index: 5, kind: input, shape index: {}]
  %s6 = inlined_call_operand.vmem [shape: bf16[32,16], index: 6, kind: input, shape index: {}]
  %s7 = inlined_call_operand.vmem [shape: f32[1,16], index: 7, kind: input, shape index: {}]
  %s8 = inlined_call_operand.vmem [shape: f32[32,16], index: 8, kind: output, shape index: {}]
  %s9 = sld [smem:[#allocation0]]
  $region42: #{tpu_custom_call.1} parent=0
    _
  %s11 = ssub.s32 1, %s9
  %s12 = scalar_select 0, %s11, %s9
  // Predicated region
  $region2: #{tpu_custom_call.1} parent=0 // pred_check
    _
  $region3: #{tpu_custom_call.1} parent=0 // pred_check_branch
    %14 = sbr.rel (0) target = $region5
  $region4: #{tpu_custom_call.1} parent=0 // pred_region
    _
  $region5: #{tpu_custom_call.1} parent=0 // pred_fallthru
    _
  // Predicated region
  $region6: #{tpu_custom_call.1} parent=0 // pred_check
    _
  $region7: #{tpu_custom_call.1} parent=0 // pred_check_branch
    %16 = sbr.rel (0) target = $region9
  $region8: #{tpu_custom_call.1} parent=0 // pred_region
    _
  $region9: #{tpu_custom_call.1} parent=0 // pred_fallthru
    _
  // Predicated region
  $region10: #{tpu_custom_call.1} parent=0 // pred_check
    _
  $region11: #{tpu_custom_call.1} parent=0 // pred_check_branch
    %18 = sbr.rel (0) target = $region13
  $region12: #{tpu_custom_call.1} parent=0 // pred_region
    _
  $region13: #{tpu_custom_call.1} parent=0 // pred_fallthru
    _
  // Predicated region
  $region14: #{tpu_custom_call.1} parent=0 // pred_check
    _
  $region15: #{tpu_custom_call.1} parent=0 // pred_check_branch
    %20 = sbr.rel (0) target = $region17
  $region16: #{tpu_custom_call.1} parent=0 // pred_region
    _
  $region17: #{tpu_custom_call.1} parent=0 // pred_fallthru
    _
  // Predicated region
  $region18: #{tpu_custom_call.1} parent=0 // pred_check
    _
  $region19: #{tpu_custom_call.1} parent=0 // pred_check_branch
    %22 = sbr.rel (0) target = $region21
  $region20: #{tpu_custom_call.1} parent=0 // pred_region
    _
  $region21: #{tpu_custom_call.1} parent=0 // pred_fallthru
    _
  // Predicated region
  $region22: #{tpu_custom_call.1} parent=0 // pred_check
    _
  $region23: #{tpu_custom_call.1} parent=0 // pred_check_branch
    %24 = sbr.rel (0) target = $region25
  $region24: #{tpu_custom_call.1} parent=0 // pred_region
    _
  $region25: #{tpu_custom_call.1} parent=0 // pred_fallthru
    _
  // Predicated region
  $region26: #{tpu_custom_call.1} parent=0 // pred_check
    _
  $region27: #{tpu_custom_call.1} parent=0 // pred_check_branch
    %26 = sbr.rel (0) target = $region29
  $region28: #{tpu_custom_call.1} parent=0 // pred_region
    _
  $region29: #{tpu_custom_call.1} parent=0 // pred_fallthru
    _
  // Predicated region
  $region30: #{tpu_custom_call.1} parent=0 // pred_check
    _
  $region31: #{tpu_custom_call.1} parent=0 // pred_check_branch
    %28 = sbr.rel (0) target = $region33
  $region32: #{tpu_custom_call.1} parent=0 // pred_region
    _
  $region33: #{tpu_custom_call.1} parent=0 // pred_fallthru
    _
  %v30 = vld [vmem:[%s0] sm:$0xf]
  %v31 = vld [vmem:[%s0 + $0x4] sm:$0xf]
  %v32 = vld [vmem:[%s0 + $0x8] sm:$0xf]
  %v33 = vld [vmem:[%s0 + $0xc] sm:$0xf]
  %v34 = vld [vmem:[%s1] sm:$0xff]
  %v35 = vld [vmem:[%s1 + $0x8] sm:$0xff]
  %v36 = vld [vmem:[%s1 + $0x10] sm:$0xff]
  %v37 = vld [vmem:[%s1 + $0x18] sm:$0xff]
  %v38 = vld [vmem:[%s1 + $0x20] sm:$0xff]
  %v39 = vld [vmem:[%s1 + $0x28] sm:$0xff]
  %v40 = vld [vmem:[%s1 + $0x30] sm:$0xff]
  %v41 = vld [vmem:[%s1 + $0x38] sm:$0xff]
  %v42 = vld [vmem:[%s1 + $0x40] sm:$0xff]
  %v43 = vld [vmem:[%s1 + $0x48] sm:$0xff]
  %v44 = vld [vmem:[%s1 + $0x50] sm:$0xff]
  %v45 = vld [vmem:[%s1 + $0x58] sm:$0xff]
  %v46 = vld [vmem:[%s2] sm:$0x3f]
  %v48 = vlaneseq
  %v49 = vshrl.u32 %v48, 7
  %v50 = vsub.s32 0, %v49
  %v51 = vrot.slane %v46, %v50
  %v52 = vlaneseq
  %v53 = vshrl.u32 %v52, 7
  %v54 = vsub.s32 1, %v53
  %v55 = vrot.slane %v46, %v54
  %v56 = vlaneseq
  %v57 = vshrl.u32 %v56, 7
  %v58 = vsub.s32 2, %v57
  %v59 = vrot.slane %v46, %v58
  %v60 = vlaneseq
  %v61 = vshrl.u32 %v60, 7
  %v62 = vsub.s32 3, %v61
  %v63 = vrot.slane %v46, %v62
  %v64 = vlaneseq
  %v65 = vshrl.u32 %v64, 7
  %v66 = vsub.s32 4, %v65
  %v67 = vrot.slane %v46, %v66
  %v68 = vlaneseq
  %v69 = vshrl.u32 %v68, 7
  %v70 = vsub.s32 5, %v69
  %v71 = vrot.slane %v46, %v70
  %v82 = vunpack.c.l.b16 %v30
  %v83 = vunpack.c.l.b16 %v31
  %v84 = vunpack.c.l.b16 %v32
  %v85 = vunpack.c.l.b16 %v33
  %v86 = vpack.c.b16 %v83, %v82
  %v87 = vpack.c.b16 %v85, %v84
  %v100 = vunpack.c.l.b16 %v34
  %v101 = vunpack.c.h.b16 %v34
  %v102 = vunpack.c.l.b16 %v35
  %v103 = vunpack.c.h.b16 %v35
  %v104 = vunpack.c.l.b16 %v36
  %v105 = vunpack.c.h.b16 %v36
  %v106 = vunpack.c.l.b16 %v37
  %v107 = vunpack.c.h.b16 %v37
  %v108 = vunpack.c.l.b16 %v38
  %v109 = vunpack.c.h.b16 %v38
  %v110 = vunpack.c.l.b16 %v39
  %v111 = vunpack.c.h.b16 %v39
  %v112 = vunpack.c.l.b16 %v40
  %v113 = vunpack.c.h.b16 %v40
  %v114 = vunpack.c.l.b16 %v41
  %v115 = vunpack.c.h.b16 %v41
  %v116 = vunpack.c.l.b16 %v42
  %v117 = vunpack.c.h.b16 %v42
  %v118 = vunpack.c.l.b16 %v43
  %v119 = vunpack.c.h.b16 %v43
  %v120 = vunpack.c.l.b16 %v44
  %v121 = vunpack.c.h.b16 %v44
  %v122 = vunpack.c.l.b16 %v45
  %v123 = vunpack.c.h.b16 %v45
  %v124 = vpack.c.b16 %v106, %v100
  %v125 = vpack.c.b16 %v107, %v101
  %v126 = vpack.c.b16 %v108, %v102
  %v127 = vpack.c.b16 %v109, %v103
  %v128 = vpack.c.b16 %v110, %v104
  %v129 = vpack.c.b16 %v111, %v105
  %v130 = vpack.c.b16 %v118, %v112
  %v131 = vpack.c.b16 %v119, %v113
  %v132 = vpack.c.b16 %v120, %v114
  %v133 = vpack.c.b16 %v121, %v115
  %v134 = vpack.c.b16 %v122, %v116
  %v135 = vpack.c.b16 %v123, %v117
  %vm148 = vcmask 261120
  %v150 = vsel %vm148, %v86, 0
  %v153 = vsel %vm148, %v87, 0
  %155 = vmatprep.subr.bf16.mxu0 %v125
  %156 = vmatpush1.bf16.msra.mxu0 %v124
  %157 = vmatprep.subr.bf16.mxu0 %v131
  %158 = vmatpush1.bf16.msra.mxu0 %v130
  %159 = vmatprep.subr.bf16.mxu0 0
  %160 = vmatpush1.bf16.msra.mxu0 0
  %161 = vmatprep.subr.bf16.mxu0 0
  %162 = vmatpush1.bf16.msra.mxu0 0
  %163 = vmatprep.subr.bf16.mxu0 0
  %164 = vmatpush1.bf16.msra.mxu0 0
  %165 = vmatprep.subr.bf16.mxu0 0
  %166 = vmatpush1.bf16.msra.mxu0 0
  %167 = vmatprep.subr.bf16.mxu0 0
  %168 = vmatpush1.bf16.msra.mxu0 0
  %169 = vmatprep.subr.bf16.mxu0 0
  %170 = vmatpush1.bf16.msra.mxu0 0
  %171 = vmatprep.subr.bf16.mxu0 0
  %172 = vmatpush1.bf16.msra.mxu0 0
  %173 = vmatprep.subr.bf16.mxu0 0
  %174 = vmatpush1.bf16.msra.mxu0 0
  %175 = vmatprep.subr.bf16.mxu0 0
  %176 = vmatpush1.bf16.msra.mxu0 0
  %177 = vmatprep.subr.bf16.mxu0 0
  %178 = vmatpush1.bf16.msra.mxu0 0
  %179 = vmatprep.subr.bf16.mxu0 0
  %180 = vmatpush1.bf16.msra.mxu0 0
  %181 = vmatprep.subr.bf16.mxu0 0
  %182 = vmatpush1.bf16.msra.mxu0 0
  %183 = vmatprep.subr.bf16.mxu0 0
  %184 = vmatpush1.bf16.msra.mxu0 0
  %185 = vmatprep.subr.bf16.mxu0 0
  %186 = vmatpush1.bf16.msra.mxu0 0
  %187 = vmatprep.mubr.bf16.mxu0 0
  %188 = vmatmul.mubr.bf16.gmra.mrb[0].mxu0 %v150
  %v189 = vpop.f32.mrb[0].mxu0
  %v190 = vadd.f32 %v51, %v189
  %v191 = vpop.f32.mrb[0].mxu0
  %v192 = vadd.f32 %v55, %v191
  %v193 = vpop.f32.mrb[0].mxu0
  %v194 = vadd.f32 %v51, %v193
  %v195 = vpop.f32.mrb[0].mxu0
  %v196 = vadd.f32 %v55, %v195
  %197 = vmatprep.mubr.bf16.mxu0 0
  %198 = vmatmul.mubr.bf16.gmra.mrb[0].mxu0 %v153
  %v199 = vpop.f32.mrb[0].mxu0
  %v200 = vadd.f32 %v51, %v199
  %v201 = vpop.f32.mrb[0].mxu0
  %v202 = vadd.f32 %v55, %v201
  %v203 = vpop.f32.mrb[0].mxu0
  %v204 = vadd.f32 %v51, %v203
  %v205 = vpop.f32.mrb[0].mxu0
  %v206 = vadd.f32 %v55, %v205
  %207 = vdwg.mxu0
  %208 = vmatprep.subr.bf16.mxu0 %v127
  %209 = vmatpush1.bf16.msra.mxu0 %v126
  %210 = vmatprep.subr.bf16.mxu0 %v133
  %211 = vmatpush1.bf16.msra.mxu0 %v132
  %212 = vmatprep.subr.bf16.mxu0 0
  %213 = vmatpush1.bf16.msra.mxu0 0
  %214 = vmatprep.subr.bf16.mxu0 0
  %215 = vmatpush1.bf16.msra.mxu0 0
  %216 = vmatprep.subr.bf16.mxu0 0
  %217 = vmatpush1.bf16.msra.mxu0 0
  %218 = vmatprep.subr.bf16.mxu0 0
  %219 = vmatpush1.bf16.msra.mxu0 0
  %220 = vmatprep.subr.bf16.mxu0 0
  %221 = vmatpush1.bf16.msra.mxu0 0
  %222 = vmatprep.subr.bf16.mxu0 0
  %223 = vmatpush1.bf16.msra.mxu0 0
  %224 = vmatprep.subr.bf16.mxu0 0
  %225 = vmatpush1.bf16.msra.mxu0 0
  %226 = vmatprep.subr.bf16.mxu0 0
  %227 = vmatpush1.bf16.msra.mxu0 0
  %228 = vmatprep.subr.bf16.mxu0 0
  %229 = vmatpush1.bf16.msra.mxu0 0
  %230 = vmatprep.subr.bf16.mxu0 0
  %231 = vmatpush1.bf16.msra.mxu0 0
  %232 = vmatprep.subr.bf16.mxu0 0
  %233 = vmatpush1.bf16.msra.mxu0 0
  %234 = vmatprep.subr.bf16.mxu0 0
  %235 = vmatpush1.bf16.msra.mxu0 0
  %236 = vmatprep.subr.bf16.mxu0 0
  %237 = vmatpush1.bf16.msra.mxu0 0
  %238 = vmatprep.subr.bf16.mxu0 0
  %239 = vmatpush1.bf16.msra.mxu0 0
  %240 = vmatprep.mubr.bf16.mxu0 0
  %241 = vmatmul.mubr.bf16.gmra.mrb[0].mxu0 %v150
  %v242 = vpop.f32.mrb[0].mxu0
  %v243 = vadd.f32 %v59, %v242
  %v244 = vpop.f32.mrb[0].mxu0
  %v245 = vadd.f32 %v63, %v244
  %v246 = vpop.f32.mrb[0].mxu0
  %v247 = vadd.f32 %v59, %v246
  %v248 = vpop.f32.mrb[0].mxu0
  %v249 = vadd.f32 %v63, %v248
  %250 = vmatprep.mubr.bf16.mxu0 0
  %251 = vmatmul.mubr.bf16.gmra.mrb[0].mxu0 %v153
  %v252 = vpop.f32.mrb[0].mxu0
  %v253 = vadd.f32 %v59, %v252
  %v254 = vpop.f32.mrb[0].mxu0
  %v255 = vadd.f32 %v63, %v254
  %v256 = vpop.f32.mrb[0].mxu0
  %v257 = vadd.f32 %v59, %v256
  %v258 = vpop.f32.mrb[0].mxu0
  %v259 = vadd.f32 %v63, %v258
  %260 = vdwg.mxu0
  %261 = vmatprep.subr.bf16.mxu0 %v129
  %262 = vmatpush1.bf16.msra.mxu0 %v128
  %263 = vmatprep.subr.bf16.mxu0 %v135
  %264 = vmatpush1.bf16.msra.mxu0 %v134
  %265 = vmatprep.subr.bf16.mxu0 0
  %266 = vmatpush1.bf16.msra.mxu0 0
  %267 = vmatprep.subr.bf16.mxu0 0
  %268 = vmatpush1.bf16.msra.mxu0 0
  %269 = vmatprep.subr.bf16.mxu0 0
  %270 = vmatpush1.bf16.msra.mxu0 0
  %271 = vmatprep.subr.bf16.mxu0 0
  %272 = vmatpush1.bf16.msra.mxu0 0
  %273 = vmatprep.subr.bf16.mxu0 0
  %274 = vmatpush1.bf16.msra.mxu0 0
  %275 = vmatprep.subr.bf16.mxu0 0
  %276 = vmatpush1.bf16.msra.mxu0 0
  %277 = vmatprep.subr.bf16.mxu0 0
  %278 = vmatpush1.bf16.msra.mxu0 0
  %279 = vmatprep.subr.bf16.mxu0 0
  %280 = vmatpush1.bf16.msra.mxu0 0
  %281 = vmatprep.subr.bf16.mxu0 0
  %282 = vmatpush1.bf16.msra.mxu0 0
  %283 = vmatprep.subr.bf16.mxu0 0
  %284 = vmatpush1.bf16.msra.mxu0 0
  %285 = vmatprep.subr.bf16.mxu0 0
  %286 = vmatpush1.bf16.msra.mxu0 0
  %287 = vmatprep.subr.bf16.mxu0 0
  %288 = vmatpush1.bf16.msra.mxu0 0
  %289 = vmatprep.subr.bf16.mxu0 0
  %290 = vmatpush1.bf16.msra.mxu0 0
  %291 = vmatprep.subr.bf16.mxu0 0
  %292 = vmatpush1.bf16.msra.mxu0 0
  %293 = vmatprep.mubr.bf16.mxu0 0
  %294 = vmatmul.mubr.bf16.gmra.mrb[0].mxu0 %v150
  %v295 = vpop.f32.mrb[0].mxu0
  %v296 = vadd.f32 %v67, %v295
  %v297 = vpop.f32.mrb[0].mxu0
  %v298 = vadd.f32 %v71, %v297
  %v299 = vpop.f32.mrb[0].mxu0
  %v300 = vadd.f32 %v67, %v299
  %v301 = vpop.f32.mrb[0].mxu0
  %v302 = vadd.f32 %v71, %v301
  %303 = vmatprep.mubr.bf16.mxu0 0
  %304 = vmatmul.mubr.bf16.gmra.mrb[0].mxu0 %v153
  %v305 = vpop.f32.mrb[0].mxu0
  %v306 = vadd.f32 %v67, %v305
  %v307 = vpop.f32.mrb[0].mxu0
  %v308 = vadd.f32 %v71, %v307
  %v309 = vpop.f32.mrb[0].mxu0
  %v310 = vadd.f32 %v67, %v309
  %v311 = vpop.f32.mrb[0].mxu0
  %v312 = vadd.f32 %v71, %v311
  %313 = vdwg.mxu0
  %v314 = vmax.f32 %v190, 0.0
  %v315 = vmax.f32 %v192, 0.0
  %v316 = vmax.f32 %v243, 0.0
  %v317 = vmax.f32 %v245, 0.0
  %v318 = vmax.f32 %v296, 0.0
  %v319 = vmax.f32 %v298, 0.0
  %v320 = vmax.f32 %v194, 0.0
  %v321 = vmax.f32 %v196, 0.0
  %v322 = vmax.f32 %v247, 0.0
  %v323 = vmax.f32 %v249, 0.0
  %v324 = vmax.f32 %v300, 0.0
  %v325 = vmax.f32 %v302, 0.0
  %v326 = vmax.f32 %v200, 0.0
  %v327 = vmax.f32 %v202, 0.0
  %v328 = vmax.f32 %v253, 0.0
  %v329 = vmax.f32 %v255, 0.0
  %v330 = vmax.f32 %v306, 0.0
  %v331 = vmax.f32 %v308, 0.0
  %v332 = vmax.f32 %v204, 0.0
  %v333 = vmax.f32 %v206, 0.0
  %v334 = vmax.f32 %v257, 0.0
  %v335 = vmax.f32 %v259, 0.0
  %v336 = vmax.f32 %v310, 0.0
  %v337 = vmax.f32 %v312, 0.0
  %v338 = vpack.c.bf16 %v320, %v314
  %v339 = vpack.c.bf16 %v321, %v315
  %v340 = vpack.c.bf16 %v322, %v316
  %v341 = vpack.c.bf16 %v323, %v317
  %v342 = vpack.c.bf16 %v324, %v318
  %v343 = vpack.c.bf16 %v325, %v319
  %v344 = vpack.c.bf16 %v332, %v326
  %v345 = vpack.c.bf16 %v333, %v327
  %v346 = vpack.c.bf16 %v334, %v328
  %v347 = vpack.c.bf16 %v335, %v329
  %v348 = vpack.c.bf16 %v336, %v330
  %v349 = vpack.c.bf16 %v337, %v331
  %v351 = vsel %vm148, %v338, 0
  %v354 = vsel %vm148, %v340, 0
  %356 = vmatprep.subr.bf16.mxu0 0
  %357 = vmatpush1.bf16.xpose.msra.mxu0 %v354
  %358 = vmatprep.subr.bf16.mxu0 0
  %359 = vmatpush1.bf16.xpose.msra.mxu0 0
  %360 = vmatprep.subr.bf16.mxu0 0
  %361 = vmatpush1.bf16.xpose.msra.mxu0 0
  %362 = vmatprep.subr.bf16.mxu0 0
  %363 = vmatpush1.bf16.xpose.msra.mxu0 0
  %364 = vmatprep.subr.bf16.mxu0 0
  %365 = vmatpush1.bf16.xpose.msra.mxu0 0
  %366 = vmatprep.subr.bf16.mxu0 0
  %367 = vmatpush1.bf16.xpose.msra.mxu0 0
  %368 = vmatprep.subr.bf16.mxu0 0
  %369 = vmatpush1.bf16.xpose.msra.mxu0 0
  %370 = vmatprep.subr.bf16.mxu0 0
  %371 = vmatpush1.bf16.xpose.msra.mxu0 0
  %372 = vmatprep.subr.bf16.mxu0 0
  %373 = vmatpush1.bf16.xpose.msra.mxu0 0
  %374 = vmatprep.subr.bf16.mxu0 0
  %375 = vmatpush1.bf16.xpose.msra.mxu0 0
  %376 = vmatprep.subr.bf16.mxu0 0
  %377 = vmatpush1.bf16.xpose.msra.mxu0 0
  %378 = vmatprep.subr.bf16.mxu0 0
  %379 = vmatpush1.bf16.xpose.msra.mxu0 0
  %380 = vmatprep.subr.bf16.mxu0 0
  %381 = vmatpush1.bf16.xpose.msra.mxu0 0
  %382 = vmatprep.subr.bf16.mxu0 0
  %383 = vmatpush1.bf16.xpose.msra.mxu0 0
  %384 = vmatprep.subr.bf16.mxu0 0
  %385 = vmatpush1.bf16.xpose.msra.mxu0 0
  %386 = vmatprep.subr.bf16.mxu0 0
  %387 = vmatpush1.bf16.xpose.msra.mxu0 0
  %388 = vmatprep.mubr.bf16.mxu0 0
  %389 = vmatmul.mubr.bf16.gmra.mrb[0].mxu0 %v351
  %v390 = vpop.f32.mrb[0].mxu0
  %v391 = vadd.f32 0.0, %v390
  %v392 = vpop.f32.mrb[0].mxu0
  %v393 = vpop.f32.mrb[0].mxu0
  %v394 = vadd.f32 0.0, %v393
  %v395 = vpop.f32.mrb[0].mxu0
  %396 = vdwg.mxu0
  %v398 = vsel %vm148, %v344, 0
  %v401 = vsel %vm148, %v346, 0
  %403 = vmatprep.subr.bf16.mxu0 0
  %404 = vmatpush1.bf16.xpose.msra.mxu0 %v401
  %405 = vmatprep.subr.bf16.mxu0 0
  %406 = vmatpush1.bf16.xpose.msra.mxu0 0
  %407 = vmatprep.subr.bf16.mxu0 0
  %408 = vmatpush1.bf16.xpose.msra.mxu0 0
  %409 = vmatprep.subr.bf16.mxu0 0
  %410 = vmatpush1.bf16.xpose.msra.mxu0 0
  %411 = vmatprep.subr.bf16.mxu0 0
  %412 = vmatpush1.bf16.xpose.msra.mxu0 0
  %413 = vmatprep.subr.bf16.mxu0 0
  %414 = vmatpush1.bf16.xpose.msra.mxu0 0
  %415 = vmatprep.subr.bf16.mxu0 0
  %416 = vmatpush1.bf16.xpose.msra.mxu0 0
  %417 = vmatprep.subr.bf16.mxu0 0
  %418 = vmatpush1.bf16.xpose.msra.mxu0 0
  %419 = vmatprep.subr.bf16.mxu0 0
  %420 = vmatpush1.bf16.xpose.msra.mxu0 0
  %421 = vmatprep.subr.bf16.mxu0 0
  %422 = vmatpush1.bf16.xpose.msra.mxu0 0
  %423 = vmatprep.subr.bf16.mxu0 0
  %424 = vmatpush1.bf16.xpose.msra.mxu0 0
  %425 = vmatprep.subr.bf16.mxu0 0
  %426 = vmatpush1.bf16.xpose.msra.mxu0 0
  %427 = vmatprep.subr.bf16.mxu0 0
  %428 = vmatpush1.bf16.xpose.msra.mxu0 0
  %429 = vmatprep.subr.bf16.mxu0 0
  %430 = vmatpush1.bf16.xpose.msra.mxu0 0
  %431 = vmatprep.subr.bf16.mxu0 0
  %432 = vmatpush1.bf16.xpose.msra.mxu0 0
  %433 = vmatprep.subr.bf16.mxu0 0
  %434 = vmatpush1.bf16.xpose.msra.mxu0 0
  %435 = vmatprep.mubr.bf16.mxu0 0
  %436 = vmatmul.mubr.bf16.gmra.mrb[0].mxu0 %v398
  %v437 = vpop.f32.mrb[0].mxu0
  %v438 = vadd.f32 0.0, %v437
  %v439 = vpop.f32.mrb[0].mxu0
  %v440 = vpop.f32.mrb[0].mxu0
  %v441 = vadd.f32 0.0, %v440
  %v442 = vpop.f32.mrb[0].mxu0
  %443 = vdwg.mxu0
  %vm444 = vcmp.gt.f32.partialorder %v391, 0.0
  %vm445 = vcmp.gt.f32.partialorder %v394, 0.0
  %vm446 = vcmp.gt.f32.partialorder %v438, 0.0
  %vm447 = vcmp.gt.f32.partialorder %v441, 0.0
  %v448 = vmul.f32 %v391, 0.2
  %v449 = vmul.f32 %v394, 0.2
  %v450 = vmul.f32 %v438, 0.2
  %v451 = vmul.f32 %v441, 0.2
  %v452 = vsel %vm444, %v391, %v448
  %v453 = vsel %vm445, %v394, %v449
  %v454 = vsel %vm446, %v438, %v450
  %v455 = vsel %vm447, %v441, %v451
  %v456 = vpack.c.bf16 %v453, %v452
  %v457 = vpack.c.bf16 %v455, %v454
  %vm458 = vcmask 130048
  %v460 = vsel %vm458, %v456, 0
  %462 = vmatprep.subr.bf16.mxu0 0
  %463 = vmatpush1.bf16.msra.mxu0 %v342
  %464 = vmatprep.subr.bf16.mxu0 0
  %465 = vmatpush1.bf16.msra.mxu0 0
  %466 = vmatprep.subr.bf16.mxu0 0
  %467 = vmatpush1.bf16.msra.mxu0 0
  %468 = vmatprep.subr.bf16.mxu0 0
  %469 = vmatpush1.bf16.msra.mxu0 0
  %470 = vmatprep.subr.bf16.mxu0 0
  %471 = vmatpush1.bf16.msra.mxu0 0
  %472 = vmatprep.subr.bf16.mxu0 0
  %473 = vmatpush1.bf16.msra.mxu0 0
  %474 = vmatprep.subr.bf16.mxu0 0
  %475 = vmatpush1.bf16.msra.mxu0 0
  %476 = vmatprep.subr.bf16.mxu0 0
  %477 = vmatpush1.bf16.msra.mxu0 0
  %478 = vmatprep.subr.bf16.mxu0 0
  %479 = vmatpush1.bf16.msra.mxu0 0
  %480 = vmatprep.subr.bf16.mxu0 0
  %481 = vmatpush1.bf16.msra.mxu0 0
  %482 = vmatprep.subr.bf16.mxu0 0
  %483 = vmatpush1.bf16.msra.mxu0 0
  %484 = vmatprep.subr.bf16.mxu0 0
  %485 = vmatpush1.bf16.msra.mxu0 0
  %486 = vmatprep.subr.bf16.mxu0 0
  %487 = vmatpush1.bf16.msra.mxu0 0
  %488 = vmatprep.subr.bf16.mxu0 0
  %489 = vmatpush1.bf16.msra.mxu0 0
  %490 = vmatprep.subr.bf16.mxu0 0
  %491 = vmatpush1.bf16.msra.mxu0 0
  %492 = vmatprep.subr.bf16.mxu0 0
  %493 = vmatpush1.bf16.msra.mxu0 0
  %494 = vmatprep.mubr.bf16.mxu0 0
  %495 = vmatmul.mubr.bf16.gmra.mrb[0].mxu0 %v460
  %v496 = vpop.f32.mrb[0].mxu0
  %v497 = vadd.f32 0.0, %v496
  %v498 = vpop.f32.mrb[0].mxu0
  %v499 = vpop.f32.mrb[0].mxu0
  %v500 = vadd.f32 0.0, %v499
  %v501 = vpop.f32.mrb[0].mxu0
  %502 = vdwg.mxu0
  %v504 = vsel %vm458, %v457, 0
  %506 = vmatprep.subr.bf16.mxu0 0
  %507 = vmatpush1.bf16.msra.mxu0 %v348
  %508 = vmatprep.subr.bf16.mxu0 0
  %509 = vmatpush1.bf16.msra.mxu0 0
  %510 = vmatprep.subr.bf16.mxu0 0
  %511 = vmatpush1.bf16.msra.mxu0 0
  %512 = vmatprep.subr.bf16.mxu0 0
  %513 = vmatpush1.bf16.msra.mxu0 0
  %514 = vmatprep.subr.bf16.mxu0 0
  %515 = vmatpush1.bf16.msra.mxu0 0
  %516 = vmatprep.subr.bf16.mxu0 0
  %517 = vmatpush1.bf16.msra.mxu0 0
  %518 = vmatprep.subr.bf16.mxu0 0
  %519 = vmatpush1.bf16.msra.mxu0 0
  %520 = vmatprep.subr.bf16.mxu0 0
  %521 = vmatpush1.bf16.msra.mxu0 0
  %522 = vmatprep.subr.bf16.mxu0 0
  %523 = vmatpush1.bf16.msra.mxu0 0
  %524 = vmatprep.subr.bf16.mxu0 0
  %525 = vmatpush1.bf16.msra.mxu0 0
  %526 = vmatprep.subr.bf16.mxu0 0
  %527 = vmatpush1.bf16.msra.mxu0 0
  %528 = vmatprep.subr.bf16.mxu0 0
  %529 = vmatpush1.bf16.msra.mxu0 0
  %530 = vmatprep.subr.bf16.mxu0 0
  %531 = vmatpush1.bf16.msra.mxu0 0
  %532 = vmatprep.subr.bf16.mxu0 0
  %533 = vmatpush1.bf16.msra.mxu0 0
  %534 = vmatprep.subr.bf16.mxu0 0
  %535 = vmatpush1.bf16.msra.mxu0 0
  %536 = vmatprep.subr.bf16.mxu0 0
  %537 = vmatpush1.bf16.msra.mxu0 0
  %538 = vmatprep.mubr.bf16.mxu0 0
  %539 = vmatmul.mubr.bf16.gmra.mrb[0].mxu0 %v504
  %v540 = vpop.f32.mrb[0].mxu0
  %v541 = vadd.f32 0.0, %v540
  %v542 = vpop.f32.mrb[0].mxu0
  %v543 = vpop.f32.mrb[0].mxu0
  %v544 = vadd.f32 0.0, %v543
  %v545 = vpop.f32.mrb[0].mxu0
  %546 = vdwg.mxu0
  %548 = vrot.lane.b32.xlu0 %v338, 96
  %v549 = vpop.permute.xlu0 %548
  %551 = vrot.lane.b32.xlu0 %v340, 96
  %v552 = vpop.permute.xlu0 %551
  %v554 = vsel %vm148, %v549, 0
  %v557 = vsel %vm148, %v552, 0
  %559 = vmatprep.subr.bf16.mxu0 0
  %560 = vmatpush1.bf16.xpose.msra.mxu0 %v557
  %561 = vmatprep.subr.bf16.mxu0 0
  %562 = vmatpush1.bf16.xpose.msra.mxu0 0
  %563 = vmatprep.subr.bf16.mxu0 0
  %564 = vmatpush1.bf16.xpose.msra.mxu0 0
  %565 = vmatprep.subr.bf16.mxu0 0
  %566 = vmatpush1.bf16.xpose.msra.mxu0 0
  %567 = vmatprep.subr.bf16.mxu0 0
  %568 = vmatpush1.bf16.xpose.msra.mxu0 0
  %569 = vmatprep.subr.bf16.mxu0 0
  %570 = vmatpush1.bf16.xpose.msra.mxu0 0
  %571 = vmatprep.subr.bf16.mxu0 0
  %572 = vmatpush1.bf16.xpose.msra.mxu0 0
  %573 = vmatprep.subr.bf16.mxu0 0
  %574 = vmatpush1.bf16.xpose.msra.mxu0 0
  %575 = vmatprep.subr.bf16.mxu0 0
  %576 = vmatpush1.bf16.xpose.msra.mxu0 0
  %577 = vmatprep.subr.bf16.mxu0 0
  %578 = vmatpush1.bf16.xpose.msra.mxu0 0
  %579 = vmatprep.subr.bf16.mxu0 0
  %580 = vmatpush1.bf16.xpose.msra.mxu0 0
  %581 = vmatprep.subr.bf16.mxu0 0
  %582 = vmatpush1.bf16.xpose.msra.mxu0 0
  %583 = vmatprep.subr.bf16.mxu0 0
  %584 = vmatpush1.bf16.xpose.msra.mxu0 0
  %585 = vmatprep.subr.bf16.mxu0 0
  %586 = vmatpush1.bf16.xpose.msra.mxu0 0
  %587 = vmatprep.subr.bf16.mxu0 0
  %588 = vmatpush1.bf16.xpose.msra.mxu0 0
  %589 = vmatprep.subr.bf16.mxu0 0
  %590 = vmatpush1.bf16.xpose.msra.mxu0 0
  %591 = vmatprep.mubr.bf16.mxu0 0
  %592 = vmatmul.mubr.bf16.gmra.mrb[0].mxu0 %v554
  %v593 = vpop.f32.mrb[0].mxu0
  %v594 = vadd.f32 0.0, %v593
  %v595 = vpop.f32.mrb[0].mxu0
  %v596 = vpop.f32.mrb[0].mxu0
  %v597 = vadd.f32 0.0, %v596
  %v598 = vpop.f32.mrb[0].mxu0
  %599 = vdwg.mxu0
  %601 = vrot.lane.b32.xlu0 %v344, 96
  %v602 = vpop.permute.xlu0 %601
  %604 = vrot.lane.b32.xlu0 %v346, 96
  %v605 = vpop.permute.xlu0 %604
  %v607 = vsel %vm148, %v602, 0
  %v610 = vsel %vm148, %v605, 0
  %612 = vmatprep.subr.bf16.mxu0 0
  %613 = vmatpush1.bf16.xpose.msra.mxu0 %v610
  %614 = vmatprep.subr.bf16.mxu0 0
  %615 = vmatpush1.bf16.xpose.msra.mxu0 0
  %616 = vmatprep.subr.bf16.mxu0 0
  %617 = vmatpush1.bf16.xpose.msra.mxu0 0
  %618 = vmatprep.subr.bf16.mxu0 0
  %619 = vmatpush1.bf16.xpose.msra.mxu0 0
  %620 = vmatprep.subr.bf16.mxu0 0
  %621 = vmatpush1.bf16.xpose.msra.mxu0 0
  %622 = vmatprep.subr.bf16.mxu0 0
  %623 = vmatpush1.bf16.xpose.msra.mxu0 0
  %624 = vmatprep.subr.bf16.mxu0 0
  %625 = vmatpush1.bf16.xpose.msra.mxu0 0
  %626 = vmatprep.subr.bf16.mxu0 0
  %627 = vmatpush1.bf16.xpose.msra.mxu0 0
  %628 = vmatprep.subr.bf16.mxu0 0
  %629 = vmatpush1.bf16.xpose.msra.mxu0 0
  %630 = vmatprep.subr.bf16.mxu0 0
  %631 = vmatpush1.bf16.xpose.msra.mxu0 0
  %632 = vmatprep.subr.bf16.mxu0 0
  %633 = vmatpush1.bf16.xpose.msra.mxu0 0
  %634 = vmatprep.subr.bf16.mxu0 0
  %635 = vmatpush1.bf16.xpose.msra.mxu0 0
  %636 = vmatprep.subr.bf16.mxu0 0
  %637 = vmatpush1.bf16.xpose.msra.mxu0 0
  %638 = vmatprep.subr.bf16.mxu0 0
  %639 = vmatpush1.bf16.xpose.msra.mxu0 0
  %640 = vmatprep.subr.bf16.mxu0 0
  %641 = vmatpush1.bf16.xpose.msra.mxu0 0
  %642 = vmatprep.subr.bf16.mxu0 0
  %643 = vmatpush1.bf16.xpose.msra.mxu0 0
  %644 = vmatprep.mubr.bf16.mxu0 0
  %645 = vmatmul.mubr.bf16.gmra.mrb[0].mxu0 %v607
  %v646 = vpop.f32.mrb[0].mxu0
  %v647 = vadd.f32 0.0, %v646
  %v648 = vpop.f32.mrb[0].mxu0
  %v649 = vpop.f32.mrb[0].mxu0
  %v650 = vadd.f32 0.0, %v649
  %v651 = vpop.f32.mrb[0].mxu0
  %652 = vdwg.mxu0
  %vm653 = vcmp.gt.f32.partialorder %v594, 0.0
  %vm654 = vcmp.gt.f32.partialorder %v597, 0.0
  %vm655 = vcmp.gt.f32.partialorder %v647, 0.0
  %vm656 = vcmp.gt.f32.partialorder %v650, 0.0
  %v657 = vmul.f32 %v594, 0.2
  %v658 = vmul.f32 %v597, 0.2
  %v659 = vmul.f32 %v647, 0.2
  %v660 = vmul.f32 %v650, 0.2
  %v661 = vsel %vm653, %v594, %v657
  %v662 = vsel %vm654, %v597, %v658
  %v663 = vsel %vm655, %v647, %v659
  %v664 = vsel %vm656, %v650, %v660
  %v665 = vpack.c.bf16 %v662, %v661
  %v666 = vpack.c.bf16 %v664, %v663
  %668 = vrot.lane.b32.xlu0 %v342, 96
  %v669 = vpop.permute.xlu0 %668
  %v672 = vsel %vm458, %v665, 0
  %674 = vmatprep.subr.bf16.mxu0 0
  %675 = vmatpush1.bf16.msra.mxu0 %v669
  %676 = vmatprep.subr.bf16.mxu0 0
  %677 = vmatpush1.bf16.msra.mxu0 0
  %678 = vmatprep.subr.bf16.mxu0 0
  %679 = vmatpush1.bf16.msra.mxu0 0
  %680 = vmatprep.subr.bf16.mxu0 0
  %681 = vmatpush1.bf16.msra.mxu0 0
  %682 = vmatprep.subr.bf16.mxu0 0
  %683 = vmatpush1.bf16.msra.mxu0 0
  %684 = vmatprep.subr.bf16.mxu0 0
  %685 = vmatpush1.bf16.msra.mxu0 0
  %686 = vmatprep.subr.bf16.mxu0 0
  %687 = vmatpush1.bf16.msra.mxu0 0
  %688 = vmatprep.subr.bf16.mxu0 0
  %689 = vmatpush1.bf16.msra.mxu0 0
  %690 = vmatprep.subr.bf16.mxu0 0
  %691 = vmatpush1.bf16.msra.mxu0 0
  %692 = vmatprep.subr.bf16.mxu0 0
  %693 = vmatpush1.bf16.msra.mxu0 0
  %694 = vmatprep.subr.bf16.mxu0 0
  %695 = vmatpush1.bf16.msra.mxu0 0
  %696 = vmatprep.subr.bf16.mxu0 0
  %697 = vmatpush1.bf16.msra.mxu0 0
  %698 = vmatprep.subr.bf16.mxu0 0
  %699 = vmatpush1.bf16.msra.mxu0 0
  %700 = vmatprep.subr.bf16.mxu0 0
  %701 = vmatpush1.bf16.msra.mxu0 0
  %702 = vmatprep.subr.bf16.mxu0 0
  %703 = vmatpush1.bf16.msra.mxu0 0
  %704 = vmatprep.subr.bf16.mxu0 0
  %705 = vmatpush1.bf16.msra.mxu0 0
  %706 = vmatprep.mubr.bf16.mxu0 0
  %707 = vmatmul.mubr.bf16.gmra.mrb[0].mxu0 %v672
  %v708 = vpop.f32.mrb[0].mxu0
  %v709 = vadd.f32 0.0, %v708
  %v710 = vpop.f32.mrb[0].mxu0
  %v711 = vpop.f32.mrb[0].mxu0
  %v712 = vadd.f32 0.0, %v711
  %v713 = vpop.f32.mrb[0].mxu0
  %714 = vdwg.mxu0
  %716 = vrot.lane.b32.xlu0 %v348, 96
  %v717 = vpop.permute.xlu0 %716
  %v720 = vsel %vm458, %v666, 0
  %722 = vmatprep.subr.bf16.mxu0 0
  %723 = vmatpush1.bf16.msra.mxu0 %v717
  %724 = vmatprep.subr.bf16.mxu0 0
  %725 = vmatpush1.bf16.msra.mxu0 0
  %726 = vmatprep.subr.bf16.mxu0 0
  %727 = vmatpush1.bf16.msra.mxu0 0
  %728 = vmatprep.subr.bf16.mxu0 0
  %729 = vmatpush1.bf16.msra.mxu0 0
  %730 = vmatprep.subr.bf16.mxu0 0
  %731 = vmatpush1.bf16.msra.mxu0 0
  %732 = vmatprep.subr.bf16.mxu0 0
  %733 = vmatpush1.bf16.msra.mxu0 0
  %734 = vmatprep.subr.bf16.mxu0 0
  %735 = vmatpush1.bf16.msra.mxu0 0
  %736 = vmatprep.subr.bf16.mxu0 0
  %737 = vmatpush1.bf16.msra.mxu0 0
  %738 = vmatprep.subr.bf16.mxu0 0
  %739 = vmatpush1.bf16.msra.mxu0 0
  %740 = vmatprep.subr.bf16.mxu0 0
  %741 = vmatpush1.bf16.msra.mxu0 0
  %742 = vmatprep.subr.bf16.mxu0 0
  %743 = vmatpush1.bf16.msra.mxu0 0
  %744 = vmatprep.subr.bf16.mxu0 0
  %745 = vmatpush1.bf16.msra.mxu0 0
  %746 = vmatprep.subr.bf16.mxu0 0
  %747 = vmatpush1.bf16.msra.mxu0 0
  %748 = vmatprep.subr.bf16.mxu0 0
  %749 = vmatpush1.bf16.msra.mxu0 0
  %750 = vmatprep.subr.bf16.mxu0 0
  %751 = vmatpush1.bf16.msra.mxu0 0
  %752 = vmatprep.subr.bf16.mxu0 0
  %753 = vmatpush1.bf16.msra.mxu0 0
  %754 = vmatprep.mubr.bf16.mxu0 0
  %755 = vmatmul.mubr.bf16.gmra.mrb[0].mxu0 %v720
  %v756 = vpop.f32.mrb[0].mxu0
  %v757 = vadd.f32 0.0, %v756
  %v758 = vpop.f32.mrb[0].mxu0
  %v759 = vpop.f32.mrb[0].mxu0
  %v760 = vadd.f32 0.0, %v759
  %v761 = vpop.f32.mrb[0].mxu0
  %762 = vdwg.mxu0
  %763 = vrot.lane.b32.xlu0 %v338, 64
  %v764 = vpop.permute.xlu0 %763
  %765 = vrot.lane.b32.xlu0 %v340, 64
  %v766 = vpop.permute.xlu0 %765
  %v768 = vsel %vm148, %v764, 0
  %v771 = vsel %vm148, %v766, 0
  %773 = vmatprep.subr.bf16.mxu0 0
  %774 = vmatpush1.bf16.xpose.msra.mxu0 %v771
  %775 = vmatprep.subr.bf16.mxu0 0
  %776 = vmatpush1.bf16.xpose.msra.mxu0 0
  %777 = vmatprep.subr.bf16.mxu0 0
  %778 = vmatpush1.bf16.xpose.msra.mxu0 0
  %779 = vmatprep.subr.bf16.mxu0 0
  %780 = vmatpush1.bf16.xpose.msra.mxu0 0
  %781 = vmatprep.subr.bf16.mxu0 0
  %782 = vmatpush1.bf16.xpose.msra.mxu0 0
  %783 = vmatprep.subr.bf16.mxu0 0
  %784 = vmatpush1.bf16.xpose.msra.mxu0 0
  %785 = vmatprep.subr.bf16.mxu0 0
  %786 = vmatpush1.bf16.xpose.msra.mxu0 0
  %787 = vmatprep.subr.bf16.mxu0 0
  %788 = vmatpush1.bf16.xpose.msra.mxu0 0
  %789 = vmatprep.subr.bf16.mxu0 0
  %790 = vmatpush1.bf16.xpose.msra.mxu0 0
  %791 = vmatprep.subr.bf16.mxu0 0
  %792 = vmatpush1.bf16.xpose.msra.mxu0 0
  %793 = vmatprep.subr.bf16.mxu0 0
  %794 = vmatpush1.bf16.xpose.msra.mxu0 0
  %795 = vmatprep.subr.bf16.mxu0 0
  %796 = vmatpush1.bf16.xpose.msra.mxu0 0
  %797 = vmatprep.subr.bf16.mxu0 0
  %798 = vmatpush1.bf16.xpose.msra.mxu0 0
  %799 = vmatprep.subr.bf16.mxu0 0
  %800 = vmatpush1.bf16.xpose.msra.mxu0 0
  %801 = vmatprep.subr.bf16.mxu0 0
  %802 = vmatpush1.bf16.xpose.msra.mxu0 0
  %803 = vmatprep.subr.bf16.mxu0 0
  %804 = vmatpush1.bf16.xpose.msra.mxu0 0
  %805 = vmatprep.mubr.bf16.mxu0 0
  %806 = vmatmul.mubr.bf16.gmra.mrb[0].mxu0 %v768
  %v807 = vpop.f32.mrb[0].mxu0
  %v808 = vadd.f32 0.0, %v807
  %v809 = vpop.f32.mrb[0].mxu0
  %v810 = vpop.f32.mrb[0].mxu0
  %v811 = vadd.f32 0.0, %v810
  %v812 = vpop.f32.mrb[0].mxu0
  %813 = vdwg.mxu0
  %814 = vrot.lane.b32.xlu0 %v344, 64
  %v815 = vpop.permute.xlu0 %814
  %816 = vrot.lane.b32.xlu0 %v346, 64
  %v817 = vpop.permute.xlu0 %816
  %v819 = vsel %vm148, %v815, 0
  %v822 = vsel %vm148, %v817, 0
  %824 = vmatprep.subr.bf16.mxu0 0
  %825 = vmatpush1.bf16.xpose.msra.mxu0 %v822
  %826 = vmatprep.subr.bf16.mxu0 0
  %827 = vmatpush1.bf16.xpose.msra.mxu0 0
  %828 = vmatprep.subr.bf16.mxu0 0
  %829 = vmatpush1.bf16.xpose.msra.mxu0 0
  %830 = vmatprep.subr.bf16.mxu0 0
  %831 = vmatpush1.bf16.xpose.msra.mxu0 0
  %832 = vmatprep.subr.bf16.mxu0 0
  %833 = vmatpush1.bf16.xpose.msra.mxu0 0
  %834 = vmatprep.subr.bf16.mxu0 0
  %835 = vmatpush1.bf16.xpose.msra.mxu0 0
  %836 = vmatprep.subr.bf16.mxu0 0
  %837 = vmatpush1.bf16.xpose.msra.mxu0 0
  %838 = vmatprep.subr.bf16.mxu0 0
  %839 = vmatpush1.bf16.xpose.msra.mxu0 0
  %840 = vmatprep.subr.bf16.mxu0 0
  %841 = vmatpush1.bf16.xpose.msra.mxu0 0
  %842 = vmatprep.subr.bf16.mxu0 0
  %843 = vmatpush1.bf16.xpose.msra.mxu0 0
  %844 = vmatprep.subr.bf16.mxu0 0
  %845 = vmatpush1.bf16.xpose.msra.mxu0 0
  %846 = vmatprep.subr.bf16.mxu0 0
  %847 = vmatpush1.bf16.xpose.msra.mxu0 0
  %848 = vmatprep.subr.bf16.mxu0 0
  %849 = vmatpush1.bf16.xpose.msra.mxu0 0
  %850 = vmatprep.subr.bf16.mxu0 0
  %851 = vmatpush1.bf16.xpose.msra.mxu0 0
  %852 = vmatprep.subr.bf16.mxu0 0
  %853 = vmatpush1.bf16.xpose.msra.mxu0 0
  %854 = vmatprep.subr.bf16.mxu0 0
  %855 = vmatpush1.bf16.xpose.msra.mxu0 0
  %856 = vmatprep.mubr.bf16.mxu0 0
  %857 = vmatmul.mubr.bf16.gmra.mrb[0].mxu0 %v819
  %v858 = vpop.f32.mrb[0].mxu0
  %v859 = vadd.f32 0.0, %v858
  %v860 = vpop.f32.mrb[0].mxu0
  %v861 = vpop.f32.mrb[0].mxu0
  %v862 = vadd.f32 0.0, %v861
  %v863 = vpop.f32.mrb[0].mxu0
  %864 = vdwg.mxu0
  %vm865 = vcmp.gt.f32.partialorder %v808, 0.0
  %vm866 = vcmp.gt.f32.partialorder %v811, 0.0
  %vm867 = vcmp.gt.f32.partialorder %v859, 0.0
  %vm868 = vcmp.gt.f32.partialorder %v862, 0.0
  %v869 = vmul.f32 %v808, 0.2
  %v870 = vmul.f32 %v811, 0.2
  %v871 = vmul.f32 %v859, 0.2
  %v872 = vmul.f32 %v862, 0.2
  %v873 = vsel %vm865, %v808, %v869
  %v874 = vsel %vm866, %v811, %v870
  %v875 = vsel %vm867, %v859, %v871
  %v876 = vsel %vm868, %v862, %v872
  %v877 = vpack.c.bf16 %v874, %v873
  %v878 = vpack.c.bf16 %v876, %v875
  %879 = vrot.lane.b32.xlu0 %v342, 64
  %v880 = vpop.permute.xlu0 %879
  %v883 = vsel %vm458, %v877, 0
  %885 = vmatprep.subr.bf16.mxu0 0
  %886 = vmatpush1.bf16.msra.mxu0 %v880
  %887 = vmatprep.subr.bf16.mxu0 0
  %888 = vmatpush1.bf16.msra.mxu0 0
  %889 = vmatprep.subr.bf16.mxu0 0
  %890 = vmatpush1.bf16.msra.mxu0 0
  %891 = vmatprep.subr.bf16.mxu0 0
  %892 = vmatpush1.bf16.msra.mxu0 0
  %893 = vmatprep.subr.bf16.mxu0 0
  %894 = vmatpush1.bf16.msra.mxu0 0
  %895 = vmatprep.subr.bf16.mxu0 0
  %896 = vmatpush1.bf16.msra.mxu0 0
  %897 = vmatprep.subr.bf16.mxu0 0
  %898 = vmatpush1.bf16.msra.mxu0 0
  %899 = vmatprep.subr.bf16.mxu0 0
  %900 = vmatpush1.bf16.msra.mxu0 0
  %901 = vmatprep.subr.bf16.mxu0 0
  %902 = vmatpush1.bf16.msra.mxu0 0
  %903 = vmatprep.subr.bf16.mxu0 0
  %904 = vmatpush1.bf16.msra.mxu0 0
  %905 = vmatprep.subr.bf16.mxu0 0
  %906 = vmatpush1.bf16.msra.mxu0 0
  %907 = vmatprep.subr.bf16.mxu0 0
  %908 = vmatpush1.bf16.msra.mxu0 0
  %909 = vmatprep.subr.bf16.mxu0 0
  %910 = vmatpush1.bf16.msra.mxu0 0
  %911 = vmatprep.subr.bf16.mxu0 0
  %912 = vmatpush1.bf16.msra.mxu0 0
  %913 = vmatprep.subr.bf16.mxu0 0
  %914 = vmatpush1.bf16.msra.mxu0 0
  %915 = vmatprep.subr.bf16.mxu0 0
  %916 = vmatpush1.bf16.msra.mxu0 0
  %917 = vmatprep.mubr.bf16.mxu0 0
  %918 = vmatmul.mubr.bf16.gmra.mrb[0].mxu0 %v883
  %v919 = vpop.f32.mrb[0].mxu0
  %v920 = vadd.f32 0.0, %v919
  %v921 = vpop.f32.mrb[0].mxu0
  %v922 = vpop.f32.mrb[0].mxu0
  %v923 = vadd.f32 0.0, %v922
  %v924 = vpop.f32.mrb[0].mxu0
  %925 = vdwg.mxu0
  %926 = vrot.lane.b32.xlu0 %v348, 64
  %v927 = vpop.permute.xlu0 %926
  %v930 = vsel %vm458, %v878, 0
  %932 = vmatprep.subr.bf16.mxu0 0
  %933 = vmatpush1.bf16.msra.mxu0 %v927
  %934 = vmatprep.subr.bf16.mxu0 0
  %935 = vmatpush1.bf16.msra.mxu0 0
  %936 = vmatprep.subr.bf16.mxu0 0
  %937 = vmatpush1.bf16.msra.mxu0 0
  %938 = vmatprep.subr.bf16.mxu0 0
  %939 = vmatpush1.bf16.msra.mxu0 0
  %940 = vmatprep.subr.bf16.mxu0 0
  %941 = vmatpush1.bf16.msra.mxu0 0
  %942 = vmatprep.subr.bf16.mxu0 0
  %943 = vmatpush1.bf16.msra.mxu0 0
  %944 = vmatprep.subr.bf16.mxu0 0
  %945 = vmatpush1.bf16.msra.mxu0 0
  %946 = vmatprep.subr.bf16.mxu0 0
  %947 = vmatpush1.bf16.msra.mxu0 0
  %948 = vmatprep.subr.bf16.mxu0 0
  %949 = vmatpush1.bf16.msra.mxu0 0
  %950 = vmatprep.subr.bf16.mxu0 0
  %951 = vmatpush1.bf16.msra.mxu0 0
  %952 = vmatprep.subr.bf16.mxu0 0
  %953 = vmatpush1.bf16.msra.mxu0 0
  %954 = vmatprep.subr.bf16.mxu0 0
  %955 = vmatpush1.bf16.msra.mxu0 0
  %956 = vmatprep.subr.bf16.mxu0 0
  %957 = vmatpush1.bf16.msra.mxu0 0
  %958 = vmatprep.subr.bf16.mxu0 0
  %959 = vmatpush1.bf16.msra.mxu0 0
  %960 = vmatprep.subr.bf16.mxu0 0
  %961 = vmatpush1.bf16.msra.mxu0 0
  %962 = vmatprep.subr.bf16.mxu0 0
  %963 = vmatpush1.bf16.msra.mxu0 0
  %964 = vmatprep.mubr.bf16.mxu0 0
  %965 = vmatmul.mubr.bf16.gmra.mrb[0].mxu0 %v930
  %v966 = vpop.f32.mrb[0].mxu0
  %v967 = vadd.f32 0.0, %v966
  %v968 = vpop.f32.mrb[0].mxu0
  %v969 = vpop.f32.mrb[0].mxu0
  %v970 = vadd.f32 0.0, %v969
  %v971 = vpop.f32.mrb[0].mxu0
  %972 = vdwg.mxu0
  %973 = vrot.lane.b32.xlu0 %v338, 32
  %v974 = vpop.permute.xlu0 %973
  %975 = vrot.lane.b32.xlu0 %v340, 32
  %v976 = vpop.permute.xlu0 %975
  %v978 = vsel %vm148, %v974, 0
  %v981 = vsel %vm148, %v976, 0
  %983 = vmatprep.subr.bf16.mxu0 0
  %984 = vmatpush1.bf16.xpose.msra.mxu0 %v981
  %985 = vmatprep.subr.bf16.mxu0 0
  %986 = vmatpush1.bf16.xpose.msra.mxu0 0
  %987 = vmatprep.subr.bf16.mxu0 0
  %988 = vmatpush1.bf16.xpose.msra.mxu0 0
  %989 = vmatprep.subr.bf16.mxu0 0
  %990 = vmatpush1.bf16.xpose.msra.mxu0 0
  %991 = vmatprep.subr.bf16.mxu0 0
  %992 = vmatpush1.bf16.xpose.msra.mxu0 0
  %993 = vmatprep.subr.bf16.mxu0 0
  %994 = vmatpush1.bf16.xpose.msra.mxu0 0
  %995 = vmatprep.subr.bf16.mxu0 0
  %996 = vmatpush1.bf16.xpose.msra.mxu0 0
  %997 = vmatprep.subr.bf16.mxu0 0
  %998 = vmatpush1.bf16.xpose.msra.mxu0 0
  %999 = vmatprep.subr.bf16.mxu0 0
  %1000 = vmatpush1.bf16.xpose.msra.mxu0 0
  %1001 = vmatprep.subr.bf16.mxu0 0
  %1002 = vmatpush1.bf16.xpose.msra.mxu0 0
  %1003 = vmatprep.subr.bf16.mxu0 0
  %1004 = vmatpush1.bf16.xpose.msra.mxu0 0
  %1005 = vmatprep.subr.bf16.mxu0 0
  %1006 = vmatpush1.bf16.xpose.msra.mxu0 0
  %1007 = vmatprep.subr.bf16.mxu0 0
  %1008 = vmatpush1.bf16.xpose.msra.mxu0 0
  %1009 = vmatprep.subr.bf16.mxu0 0
  %1010 = vmatpush1.bf16.xpose.msra.mxu0 0
  %1011 = vmatprep.subr.bf16.mxu0 0
  %1012 = vmatpush1.bf16.xpose.msra.mxu0 0
  %1013 = vmatprep.subr.bf16.mxu0 0
  %1014 = vmatpush1.bf16.xpose.msra.mxu0 0
  %1015 = vmatprep.mubr.bf16.mxu0 0
  %1016 = vmatmul.mubr.bf16.gmra.mrb[0].mxu0 %v978
  %v1017 = vpop.f32.mrb[0].mxu0
  %v1018 = vadd.f32 0.0, %v1017
  %v1019 = vpop.f32.mrb[0].mxu0
  %v1020 = vpop.f32.mrb[0].mxu0
  %v1021 = vadd.f32 0.0, %v1020
  %v1022 = vpop.f32.mrb[0].mxu0
  %1023 = vdwg.mxu0
  %1024 = vrot.lane.b32.xlu0 %v344, 32
  %v1025 = vpop.permute.xlu0 %1024
  %1026 = vrot.lane.b32.xlu0 %v346, 32
  %v1027 = vpop.permute.xlu0 %1026
  %v1029 = vsel %vm148, %v1025, 0
  %v1032 = vsel %vm148, %v1027, 0
  %1034 = vmatprep.subr.bf16.mxu0 0
  %1035 = vmatpush1.bf16.xpose.msra.mxu0 %v1032
  %1036 = vmatprep.subr.bf16.mxu0 0
  %1037 = vmatpush1.bf16.xpose.msra.mxu0 0
  %1038 = vmatprep.subr.bf16.mxu0 0
  %1039 = vmatpush1.bf16.xpose.msra.mxu0 0
  %1040 = vmatprep.subr.bf16.mxu0 0
  %1041 = vmatpush1.bf16.xpose.msra.mxu0 0
  %1042 = vmatprep.subr.bf16.mxu0 0
  %1043 = vmatpush1.bf16.xpose.msra.mxu0 0
  %1044 = vmatprep.subr.bf16.mxu0 0
  %1045 = vmatpush1.bf16.xpose.msra.mxu0 0
  %1046 = vmatprep.subr.bf16.mxu0 0
  %1047 = vmatpush1.bf16.xpose.msra.mxu0 0
  %1048 = vmatprep.subr.bf16.mxu0 0
  %1049 = vmatpush1.bf16.xpose.msra.mxu0 0
  %1050 = vmatprep.subr.bf16.mxu0 0
  %1051 = vmatpush1.bf16.xpose.msra.mxu0 0
  %1052 = vmatprep.subr.bf16.mxu0 0
  %1053 = vmatpush1.bf16.xpose.msra.mxu0 0
  %1054 = vmatprep.subr.bf16.mxu0 0
  %1055 = vmatpush1.bf16.xpose.msra.mxu0 0
  %1056 = vmatprep.subr.bf16.mxu0 0
  %1057 = vmatpush1.bf16.xpose.msra.mxu0 0
  %1058 = vmatprep.subr.bf16.mxu0 0
  %1059 = vmatpush1.bf16.xpose.msra.mxu0 0
  %1060 = vmatprep.subr.bf16.mxu0 0
  %1061 = vmatpush1.bf16.xpose.msra.mxu0 0
  %1062 = vmatprep.subr.bf16.mxu0 0
  %1063 = vmatpush1.bf16.xpose.msra.mxu0 0
  %1064 = vmatprep.subr.bf16.mxu0 0
  %1065 = vmatpush1.bf16.xpose.msra.mxu0 0
  %1066 = vmatprep.mubr.bf16.mxu0 0
  %1067 = vmatmul.mubr.bf16.gmra.mrb[0].mxu0 %v1029
  %v1068 = vpop.f32.mrb[0].mxu0
  %v1069 = vadd.f32 0.0, %v1068
  %v1070 = vpop.f32.mrb[0].mxu0
  %v1071 = vpop.f32.mrb[0].mxu0
  %v1072 = vadd.f32 0.0, %v1071
  %v1073 = vpop.f32.mrb[0].mxu0
  %1074 = vdwg.mxu0
  %vm1075 = vcmp.gt.f32.partialorder %v1018, 0.0
  %vm1076 = vcmp.gt.f32.partialorder %v1021, 0.0
  %vm1077 = vcmp.gt.f32.partialorder %v1069, 0.0
  %vm1078 = vcmp.gt.f32.partialorder %v1072, 0.0
  %v1079 = vmul.f32 %v1018, 0.2
  %v1080 = vmul.f32 %v1021, 0.2
  %v1081 = vmul.f32 %v1069, 0.2
  %v1082 = vmul.f32 %v1072, 0.2
  %v1083 = vsel %vm1075, %v1018, %v1079
  %v1084 = vsel %vm1076, %v1021, %v1080
  %v1085 = vsel %vm1077, %v1069, %v1081
  %v1086 = vsel %vm1078, %v1072, %v1082
  %v1087 = vpack.c.bf16 %v1084, %v1083
  %v1088 = vpack.c.bf16 %v1086, %v1085
  %1089 = vrot.lane.b32.xlu0 %v342, 32
  %v1090 = vpop.permute.xlu0 %1089
  %v1093 = vsel %vm458, %v1087, 0
  %1095 = vmatprep.subr.bf16.mxu0 0
  %1096 = vmatpush1.bf16.msra.mxu0 %v1090
  %1097 = vmatprep.subr.bf16.mxu0 0
  %1098 = vmatpush1.bf16.msra.mxu0 0
  %1099 = vmatprep.subr.bf16.mxu0 0
  %1100 = vmatpush1.bf16.msra.mxu0 0
  %1101 = vmatprep.subr.bf16.mxu0 0
  %1102 = vmatpush1.bf16.msra.mxu0 0
  %1103 = vmatprep.subr.bf16.mxu0 0
  %1104 = vmatpush1.bf16.msra.mxu0 0
  %1105 = vmatprep.subr.bf16.mxu0 0
  %1106 = vmatpush1.bf16.msra.mxu0 0
  %1107 = vmatprep.subr.bf16.mxu0 0
  %1108 = vmatpush1.bf16.msra.mxu0 0
  %1109 = vmatprep.subr.bf16.mxu0 0
  %1110 = vmatpush1.bf16.msra.mxu0 0
  %1111 = vmatprep.subr.bf16.mxu0 0
  %1112 = vmatpush1.bf16.msra.mxu0 0
  %1113 = vmatprep.subr.bf16.mxu0 0
  %1114 = vmatpush1.bf16.msra.mxu0 0
  %1115 = vmatprep.subr.bf16.mxu0 0
  %1116 = vmatpush1.bf16.msra.mxu0 0
  %1117 = vmatprep.subr.bf16.mxu0 0
  %1118 = vmatpush1.bf16.msra.mxu0 0
  %1119 = vmatprep.subr.bf16.mxu0 0
  %1120 = vmatpush1.bf16.msra.mxu0 0
  %1121 = vmatprep.subr.bf16.mxu0 0
  %1122 = vmatpush1.bf16.msra.mxu0 0
  %1123 = vmatprep.subr.bf16.mxu0 0
  %1124 = vmatpush1.bf16.msra.mxu0 0
  %1125 = vmatprep.subr.bf16.mxu0 0
  %1126 = vmatpush1.bf16.msra.mxu0 0
  %1127 = vmatprep.mubr.bf16.mxu0 0
  %1128 = vmatmul.mubr.bf16.gmra.mrb[0].mxu0 %v1093
  %v1129 = vpop.f32.mrb[0].mxu0
  %v1130 = vadd.f32 0.0, %v1129
  %v1131 = vpop.f32.mrb[0].mxu0
  %v1132 = vpop.f32.mrb[0].mxu0
  %v1133 = vadd.f32 0.0, %v1132
  %v1134 = vpop.f32.mrb[0].mxu0
  %1135 = vdwg.mxu0
  %1136 = vrot.lane.b32.xlu0 %v348, 32
  %v1137 = vpop.permute.xlu0 %1136
  %v1140 = vsel %vm458, %v1088, 0
  %1142 = vmatprep.subr.bf16.mxu0 0
  %1143 = vmatpush1.bf16.msra.mxu0 %v1137
  %1144 = vmatprep.subr.bf16.mxu0 0
  %1145 = vmatpush1.bf16.msra.mxu0 0
  %1146 = vmatprep.subr.bf16.mxu0 0
  %1147 = vmatpush1.bf16.msra.mxu0 0
  %1148 = vmatprep.subr.bf16.mxu0 0
  %1149 = vmatpush1.bf16.msra.mxu0 0
  %1150 = vmatprep.subr.bf16.mxu0 0
  %1151 = vmatpush1.bf16.msra.mxu0 0
  %1152 = vmatprep.subr.bf16.mxu0 0
  %1153 = vmatpush1.bf16.msra.mxu0 0
  %1154 = vmatprep.subr.bf16.mxu0 0
  %1155 = vmatpush1.bf16.msra.mxu0 0
  %1156 = vmatprep.subr.bf16.mxu0 0
  %1157 = vmatpush1.bf16.msra.mxu0 0
  %1158 = vmatprep.subr.bf16.mxu0 0
  %1159 = vmatpush1.bf16.msra.mxu0 0
  %1160 = vmatprep.subr.bf16.mxu0 0
  %1161 = vmatpush1.bf16.msra.mxu0 0
  %1162 = vmatprep.subr.bf16.mxu0 0
  %1163 = vmatpush1.bf16.msra.mxu0 0
  %1164 = vmatprep.subr.bf16.mxu0 0
  %1165 = vmatpush1.bf16.msra.mxu0 0
  %1166 = vmatprep.subr.bf16.mxu0 0
  %1167 = vmatpush1.bf16.msra.mxu0 0
  %1168 = vmatprep.subr.bf16.mxu0 0
  %1169 = vmatpush1.bf16.msra.mxu0 0
  %1170 = vmatprep.subr.bf16.mxu0 0
  %1171 = vmatpush1.bf16.msra.mxu0 0
  %1172 = vmatprep.subr.bf16.mxu0 0
  %1173 = vmatpush1.bf16.msra.mxu0 0
  %1174 = vmatprep.mubr.bf16.mxu0 0
  %1175 = vmatmul.mubr.bf16.gmra.mrb[0].mxu0 %v1140
  %v1176 = vpop.f32.mrb[0].mxu0
  %v1177 = vadd.f32 0.0, %v1176
  %v1178 = vpop.f32.mrb[0].mxu0
  %v1179 = vpop.f32.mrb[0].mxu0
  %v1180 = vadd.f32 0.0, %v1179
  %v1181 = vpop.f32.mrb[0].mxu0
  %1182 = vdwg.mxu0
  %v1184 = vsel %vm148, %v339, 0
  %v1187 = vsel %vm148, %v341, 0
  %1189 = vmatprep.subr.bf16.mxu0 0
  %1190 = vmatpush1.bf16.xpose.msra.mxu0 %v1187
  %1191 = vmatprep.subr.bf16.mxu0 0
  %1192 = vmatpush1.bf16.xpose.msra.mxu0 0
  %1193 = vmatprep.subr.bf16.mxu0 0
  %1194 = vmatpush1.bf16.xpose.msra.mxu0 0
  %1195 = vmatprep.subr.bf16.mxu0 0
  %1196 = vmatpush1.bf16.xpose.msra.mxu0 0
  %1197 = vmatprep.subr.bf16.mxu0 0
  %1198 = vmatpush1.bf16.xpose.msra.mxu0 0
  %1199 = vmatprep.subr.bf16.mxu0 0
  %1200 = vmatpush1.bf16.xpose.msra.mxu0 0
  %1201 = vmatprep.subr.bf16.mxu0 0
  %1202 = vmatpush1.bf16.xpose.msra.mxu0 0
  %1203 = vmatprep.subr.bf16.mxu0 0
  %1204 = vmatpush1.bf16.xpose.msra.mxu0 0
  %1205 = vmatprep.subr.bf16.mxu0 0
  %1206 = vmatpush1.bf16.xpose.msra.mxu0 0
  %1207 = vmatprep.subr.bf16.mxu0 0
  %1208 = vmatpush1.bf16.xpose.msra.mxu0 0
  %1209 = vmatprep.subr.bf16.mxu0 0
  %1210 = vmatpush1.bf16.xpose.msra.mxu0 0
  %1211 = vmatprep.subr.bf16.mxu0 0
  %1212 = vmatpush1.bf16.xpose.msra.mxu0 0
  %1213 = vmatprep.subr.bf16.mxu0 0
  %1214 = vmatpush1.bf16.xpose.msra.mxu0 0
  %1215 = vmatprep.subr.bf16.mxu0 0
  %1216 = vmatpush1.bf16.xpose.msra.mxu0 0
  %1217 = vmatprep.subr.bf16.mxu0 0
  %1218 = vmatpush1.bf16.xpose.msra.mxu0 0
  %1219 = vmatprep.subr.bf16.mxu0 0
  %1220 = vmatpush1.bf16.xpose.msra.mxu0 0
  %1221 = vmatprep.mubr.bf16.mxu0 0
  %1222 = vmatmul.mubr.bf16.gmra.mrb[0].mxu0 %v1184
  %v1223 = vpop.f32.mrb[0].mxu0
  %v1224 = vadd.f32 0.0, %v1223
  %v1225 = vpop.f32.mrb[0].mxu0
  %v1226 = vpop.f32.mrb[0].mxu0
  %v1227 = vadd.f32 0.0, %v1226
  %v1228 = vpop.f32.mrb[0].mxu0
  %1229 = vdwg.mxu0
  %v1231 = vsel %vm148, %v345, 0
  %v1234 = vsel %vm148, %v347, 0
  %1236 = vmatprep.subr.bf16.mxu0 0
  %1237 = vmatpush1.bf16.xpose.msra.mxu0 %v1234
  %1238 = vmatprep.subr.bf16.mxu0 0
  %1239 = vmatpush1.bf16.xpose.msra.mxu0 0
  %1240 = vmatprep.subr.bf16.mxu0 0
  %1241 = vmatpush1.bf16.xpose.msra.mxu0 0
  %1242 = vmatprep.subr.bf16.mxu0 0
  %1243 = vmatpush1.bf16.xpose.msra.mxu0 0
  %1244 = vmatprep.subr.bf16.mxu0 0
  %1245 = vmatpush1.bf16.xpose.msra.mxu0 0
  %1246 = vmatprep.subr.bf16.mxu0 0
  %1247 = vmatpush1.bf16.xpose.msra.mxu0 0
  %1248 = vmatprep.subr.bf16.mxu0 0
  %1249 = vmatpush1.bf16.xpose.msra.mxu0 0
  %1250 = vmatprep.subr.bf16.mxu0 0
  %1251 = vmatpush1.bf16.xpose.msra.mxu0 0
  %1252 = vmatprep.subr.bf16.mxu0 0
  %1253 = vmatpush1.bf16.xpose.msra.mxu0 0
  %1254 = vmatprep.subr.bf16.mxu0 0
  %1255 = vmatpush1.bf16.xpose.msra.mxu0 0
  %1256 = vmatprep.subr.bf16.mxu0 0
  %1257 = vmatpush1.bf16.xpose.msra.mxu0 0
  %1258 = vmatprep.subr.bf16.mxu0 0
  %1259 = vmatpush1.bf16.xpose.msra.mxu0 0
  %1260 = vmatprep.subr.bf16.mxu0 0
  %1261 = vmatpush1.bf16.xpose.msra.mxu0 0
  %1262 = vmatprep.subr.bf16.mxu0 0
  %1263 = vmatpush1.bf16.xpose.msra.mxu0 0
  %1264 = vmatprep.subr.bf16.mxu0 0
  %1265 = vmatpush1.bf16.xpose.msra.mxu0 0
  %1266 = vmatprep.subr.bf16.mxu0 0
  %1267 = vmatpush1.bf16.xpose.msra.mxu0 0
  %1268 = vmatprep.mubr.bf16.mxu0 0
  %1269 = vmatmul.mubr.bf16.gmra.mrb[0].mxu0 %v1231
  %v1270 = vpop.f32.mrb[0].mxu0
  %v1271 = vadd.f32 0.0, %v1270
  %v1272 = vpop.f32.mrb[0].mxu0
  %v1273 = vpop.f32.mrb[0].mxu0
  %v1274 = vadd.f32 0.0, %v1273
  %v1275 = vpop.f32.mrb[0].mxu0
  %1276 = vdwg.mxu0
  %vm1277 = vcmp.gt.f32.partialorder %v1224, 0.0
  %vm1278 = vcmp.gt.f32.partialorder %v1227, 0.0
  %vm1279 = vcmp.gt.f32.partialorder %v1271, 0.0
  %vm1280 = vcmp.gt.f32.partialorder %v1274, 0.0
  %v1281 = vmul.f32 %v1224, 0.2
  %v1282 = vmul.f32 %v1227, 0.2
  %v1283 = vmul.f32 %v1271, 0.2
  %v1284 = vmul.f32 %v1274, 0.2
  %v1285 = vsel %vm1277, %v1224, %v1281
  %v1286 = vsel %vm1278, %v1227, %v1282
  %v1287 = vsel %vm1279, %v1271, %v1283
  %v1288 = vsel %vm1280, %v1274, %v1284
  %v1289 = vpack.c.bf16 %v1286, %v1285
  %v1290 = vpack.c.bf16 %v1288, %v1287
  %v1292 = vsel %vm458, %v1289, 0
  %1294 = vmatprep.subr.bf16.mxu0 0
  %1295 = vmatpush1.bf16.msra.mxu0 %v343
  %1296 = vmatprep.subr.bf16.mxu0 0
  %1297 = vmatpush1.bf16.msra.mxu0 0
  %1298 = vmatprep.subr.bf16.mxu0 0
  %1299 = vmatpush1.bf16.msra.mxu0 0
  %1300 = vmatprep.subr.bf16.mxu0 0
  %1301 = vmatpush1.bf16.msra.mxu0 0
  %1302 = vmatprep.subr.bf16.mxu0 0
  %1303 = vmatpush1.bf16.msra.mxu0 0
  %1304 = vmatprep.subr.bf16.mxu0 0
  %1305 = vmatpush1.bf16.msra.mxu0 0
  %1306 = vmatprep.subr.bf16.mxu0 0
  %1307 = vmatpush1.bf16.msra.mxu0 0
  %1308 = vmatprep.subr.bf16.mxu0 0
  %1309 = vmatpush1.bf16.msra.mxu0 0
  %1310 = vmatprep.subr.bf16.mxu0 0
  %1311 = vmatpush1.bf16.msra.mxu0 0
  %1312 = vmatprep.subr.bf16.mxu0 0
  %1313 = vmatpush1.bf16.msra.mxu0 0
  %1314 = vmatprep.subr.bf16.mxu0 0
  %1315 = vmatpush1.bf16.msra.mxu0 0
  %1316 = vmatprep.subr.bf16.mxu0 0
  %1317 = vmatpush1.bf16.msra.mxu0 0
  %1318 = vmatprep.subr.bf16.mxu0 0
  %1319 = vmatpush1.bf16.msra.mxu0 0
  %1320 = vmatprep.subr.bf16.mxu0 0
  %1321 = vmatpush1.bf16.msra.mxu0 0
  %1322 = vmatprep.subr.bf16.mxu0 0
  %1323 = vmatpush1.bf16.msra.mxu0 0
  %1324 = vmatprep.subr.bf16.mxu0 0
  %1325 = vmatpush1.bf16.msra.mxu0 0
  %1326 = vmatprep.mubr.bf16.mxu0 0
  %1327 = vmatmul.mubr.bf16.gmra.mrb[0].mxu0 %v1292
  %v1328 = vpop.f32.mrb[0].mxu0
  %v1329 = vadd.f32 0.0, %v1328
  %v1330 = vpop.f32.mrb[0].mxu0
  %v1331 = vpop.f32.mrb[0].mxu0
  %v1332 = vadd.f32 0.0, %v1331
  %v1333 = vpop.f32.mrb[0].mxu0
  %1334 = vdwg.mxu0
  %v1336 = vsel %vm458, %v1290, 0
  %1338 = vmatprep.subr.bf16.mxu0 0
  %1339 = vmatpush1.bf16.msra.mxu0 %v349
  %1340 = vmatprep.subr.bf16.mxu0 0
  %1341 = vmatpush1.bf16.msra.mxu0 0
  %1342 = vmatprep.subr.bf16.mxu0 0
  %1343 = vmatpush1.bf16.msra.mxu0 0
  %1344 = vmatprep.subr.bf16.mxu0 0
  %1345 = vmatpush1.bf16.msra.mxu0 0
  %1346 = vmatprep.subr.bf16.mxu0 0
  %1347 = vmatpush1.bf16.msra.mxu0 0
  %1348 = vmatprep.subr.bf16.mxu0 0
  %1349 = vmatpush1.bf16.msra.mxu0 0
  %1350 = vmatprep.subr.bf16.mxu0 0
  %1351 = vmatpush1.bf16.msra.mxu0 0
  %1352 = vmatprep.subr.bf16.mxu0 0
  %1353 = vmatpush1.bf16.msra.mxu0 0
  %1354 = vmatprep.subr.bf16.mxu0 0
  %1355 = vmatpush1.bf16.msra.mxu0 0
  %1356 = vmatprep.subr.bf16.mxu0 0
  %1357 = vmatpush1.bf16.msra.mxu0 0
  %1358 = vmatprep.subr.bf16.mxu0 0
  %1359 = vmatpush1.bf16.msra.mxu0 0
  %1360 = vmatprep.subr.bf16.mxu0 0
  %1361 = vmatpush1.bf16.msra.mxu0 0
  %1362 = vmatprep.subr.bf16.mxu0 0
  %1363 = vmatpush1.bf16.msra.mxu0 0
  %1364 = vmatprep.subr.bf16.mxu0 0
  %1365 = vmatpush1.bf16.msra.mxu0 0
  %1366 = vmatprep.subr.bf16.mxu0 0
  %1367 = vmatpush1.bf16.msra.mxu0 0
  %1368 = vmatprep.subr.bf16.mxu0 0
  %1369 = vmatpush1.bf16.msra.mxu0 0
  %1370 = vmatprep.mubr.bf16.mxu0 0
  %1371 = vmatmul.mubr.bf16.gmra.mrb[0].mxu0 %v1336
  %v1372 = vpop.f32.mrb[0].mxu0
  %v1373 = vadd.f32 0.0, %v1372
  %v1374 = vpop.f32.mrb[0].mxu0
  %v1375 = vpop.f32.mrb[0].mxu0
  %v1376 = vadd.f32 0.0, %v1375
  %v1377 = vpop.f32.mrb[0].mxu0
  %1378 = vdwg.mxu0
  %1380 = vrot.lane.b32.xlu0 %v339, 96
  %v1381 = vpop.permute.xlu0 %1380
  %1383 = vrot.lane.b32.xlu0 %v341, 96
  %v1384 = vpop.permute.xlu0 %1383
  %v1386 = vsel %vm148, %v1381, 0
  %v1389 = vsel %vm148, %v1384, 0
  %1391 = vmatprep.subr.bf16.mxu0 0
  %1392 = vmatpush1.bf16.xpose.msra.mxu0 %v1389
  %1393 = vmatprep.subr.bf16.mxu0 0
  %1394 = vmatpush1.bf16.xpose.msra.mxu0 0
  %1395 = vmatprep.subr.bf16.mxu0 0
  %1396 = vmatpush1.bf16.xpose.msra.mxu0 0
  %1397 = vmatprep.subr.bf16.mxu0 0
  %1398 = vmatpush1.bf16.xpose.msra.mxu0 0
  %1399 = vmatprep.subr.bf16.mxu0 0
  %1400 = vmatpush1.bf16.xpose.msra.mxu0 0
  %1401 = vmatprep.subr.bf16.mxu0 0
  %1402 = vmatpush1.bf16.xpose.msra.mxu0 0
  %1403 = vmatprep.subr.bf16.mxu0 0
  %1404 = vmatpush1.bf16.xpose.msra.mxu0 0
  %1405 = vmatprep.subr.bf16.mxu0 0
  %1406 = vmatpush1.bf16.xpose.msra.mxu0 0
  %1407 = vmatprep.subr.bf16.mxu0 0
  %1408 = vmatpush1.bf16.xpose.msra.mxu0 0
  %1409 = vmatprep.subr.bf16.mxu0 0
  %1410 = vmatpush1.bf16.xpose.msra.mxu0 0
  %1411 = vmatprep.subr.bf16.mxu0 0
  %1412 = vmatpush1.bf16.xpose.msra.mxu0 0
  %1413 = vmatprep.subr.bf16.mxu0 0
  %1414 = vmatpush1.bf16.xpose.msra.mxu0 0
  %1415 = vmatprep.subr.bf16.mxu0 0
  %1416 = vmatpush1.bf16.xpose.msra.mxu0 0
  %1417 = vmatprep.subr.bf16.mxu0 0
  %1418 = vmatpush1.bf16.xpose.msra.mxu0 0
  %1419 = vmatprep.subr.bf16.mxu0 0
  %1420 = vmatpush1.bf16.xpose.msra.mxu0 0
  %1421 = vmatprep.subr.bf16.mxu0 0
  %1422 = vmatpush1.bf16.xpose.msra.mxu0 0
  %1423 = vmatprep.mubr.bf16.mxu0 0
  %1424 = vmatmul.mubr.bf16.gmra.mrb[0].mxu0 %v1386
  %v1425 = vpop.f32.mrb[0].mxu0
  %v1426 = vadd.f32 0.0, %v1425
  %v1427 = vpop.f32.mrb[0].mxu0
  %v1428 = vpop.f32.mrb[0].mxu0
  %v1429 = vadd.f32 0.0, %v1428
  %v1430 = vpop.f32.mrb[0].mxu0
  %1431 = vdwg.mxu0
  %1433 = vrot.lane.b32.xlu0 %v345, 96
  %v1434 = vpop.permute.xlu0 %1433
  %1436 = vrot.lane.b32.xlu0 %v347, 96
  %v1437 = vpop.permute.xlu0 %1436
  %v1439 = vsel %vm148, %v1434, 0
  %v1442 = vsel %vm148, %v1437, 0
  %1444 = vmatprep.subr.bf16.mxu0 0
  %1445 = vmatpush1.bf16.xpose.msra.mxu0 %v1442
  %1446 = vmatprep.subr.bf16.mxu0 0
  %1447 = vmatpush1.bf16.xpose.msra.mxu0 0
  %1448 = vmatprep.subr.bf16.mxu0 0
  %1449 = vmatpush1.bf16.xpose.msra.mxu0 0
  %1450 = vmatprep.subr.bf16.mxu0 0
  %1451 = vmatpush1.bf16.xpose.msra.mxu0 0
  %1452 = vmatprep.subr.bf16.mxu0 0
  %1453 = vmatpush1.bf16.xpose.msra.mxu0 0
  %1454 = vmatprep.subr.bf16.mxu0 0
  %1455 = vmatpush1.bf16.xpose.msra.mxu0 0
  %1456 = vmatprep.subr.bf16.mxu0 0
  %1457 = vmatpush1.bf16.xpose.msra.mxu0 0
  %1458 = vmatprep.subr.bf16.mxu0 0
  %1459 = vmatpush1.bf16.xpose.msra.mxu0 0
  %1460 = vmatprep.subr.bf16.mxu0 0
  %1461 = vmatpush1.bf16.xpose.msra.mxu0 0
  %1462 = vmatprep.subr.bf16.mxu0 0
  %1463 = vmatpush1.bf16.xpose.msra.mxu0 0
  %1464 = vmatprep.subr.bf16.mxu0 0
  %1465 = vmatpush1.bf16.xpose.msra.mxu0 0
  %1466 = vmatprep.subr.bf16.mxu0 0
  %1467 = vmatpush1.bf16.xpose.msra.mxu0 0
  %1468 = vmatprep.subr.bf16.mxu0 0
  %1469 = vmatpush1.bf16.xpose.msra.mxu0 0
  %1470 = vmatprep.subr.bf16.mxu0 0
  %1471 = vmatpush1.bf16.xpose.msra.mxu0 0
  %1472 = vmatprep.subr.bf16.mxu0 0
  %1473 = vmatpush1.bf16.xpose.msra.mxu0 0
  %1474 = vmatprep.subr.bf16.mxu0 0
  %1475 = vmatpush1.bf16.xpose.msra.mxu0 0
  %1476 = vmatprep.mubr.bf16.mxu0 0
  %1477 = vmatmul.mubr.bf16.gmra.mrb[0].mxu0 %v1439
  %v1478 = vpop.f32.mrb[0].mxu0
  %v1479 = vadd.f32 0.0, %v1478
  %v1480 = vpop.f32.mrb[0].mxu0
  %v1481 = vpop.f32.mrb[0].mxu0
  %v1482 = vadd.f32 0.0, %v1481
  %v1483 = vpop.f32.mrb[0].mxu0
  %1484 = vdwg.mxu0
  %vm1485 = vcmp.gt.f32.partialorder %v1426, 0.0
  %vm1486 = vcmp.gt.f32.partialorder %v1429, 0.0
  %vm1487 = vcmp.gt.f32.partialorder %v1479, 0.0
  %vm1488 = vcmp.gt.f32.partialorder %v1482, 0.0
  %v1489 = vmul.f32 %v1426, 0.2
  %v1490 = vmul.f32 %v1429, 0.2
  %v1491 = vmul.f32 %v1479, 0.2
  %v1492 = vmul.f32 %v1482, 0.2
  %v1493 = vsel %vm1485, %v1426, %v1489
  %v1494 = vsel %vm1486, %v1429, %v1490
  %v1495 = vsel %vm1487, %v1479, %v1491
  %v1496 = vsel %vm1488, %v1482, %v1492
  %v1497 = vpack.c.bf16 %v1494, %v1493
  %v1498 = vpack.c.bf16 %v1496, %v1495
  %1500 = vrot.lane.b32.xlu0 %v343, 96
  %v1501 = vpop.permute.xlu0 %1500
  %v1504 = vsel %vm458, %v1497, 0
  %1506 = vmatprep.subr.bf16.mxu0 0
  %1507 = vmatpush1.bf16.msra.mxu0 %v1501
  %1508 = vmatprep.subr.bf16.mxu0 0
  %1509 = vmatpush1.bf16.msra.mxu0 0
  %1510 = vmatprep.subr.bf16.mxu0 0
  %1511 = vmatpush1.bf16.msra.mxu0 0
  %1512 = vmatprep.subr.bf16.mxu0 0
  %1513 = vmatpush1.bf16.msra.mxu0 0
  %1514 = vmatprep.subr.bf16.mxu0 0
  %1515 = vmatpush1.bf16.msra.mxu0 0
  %1516 = vmatprep.subr.bf16.mxu0 0
  %1517 = vmatpush1.bf16.msra.mxu0 0
  %1518 = vmatprep.subr.bf16.mxu0 0
  %1519 = vmatpush1.bf16.msra.mxu0 0
  %1520 = vmatprep.subr.bf16.mxu0 0
  %1521 = vmatpush1.bf16.msra.mxu0 0
  %1522 = vmatprep.subr.bf16.mxu0 0
  %1523 = vmatpush1.bf16.msra.mxu0 0
  %1524 = vmatprep.subr.bf16.mxu0 0
  %1525 = vmatpush1.bf16.msra.mxu0 0
  %1526 = vmatprep.subr.bf16.mxu0 0
  %1527 = vmatpush1.bf16.msra.mxu0 0
  %1528 = vmatprep.subr.bf16.mxu0 0
  %1529 = vmatpush1.bf16.msra.mxu0 0
  %1530 = vmatprep.subr.bf16.mxu0 0
  %1531 = vmatpush1.bf16.msra.mxu0 0
  %1532 = vmatprep.subr.bf16.mxu0 0
  %1533 = vmatpush1.bf16.msra.mxu0 0
  %1534 = vmatprep.subr.bf16.mxu0 0
  %1535 = vmatpush1.bf16.msra.mxu0 0
  %1536 = vmatprep.subr.bf16.mxu0 0
  %1537 = vmatpush1.bf16.msra.mxu0 0
  %1538 = vmatprep.mubr.bf16.mxu0 0
  %1539 = vmatmul.mubr.bf16.gmra.mrb[0].mxu0 %v1504
  %v1540 = vpop.f32.mrb[0].mxu0
  %v1541 = vadd.f32 0.0, %v1540
  %v1542 = vpop.f32.mrb[0].mxu0
  %v1543 = vpop.f32.mrb[0].mxu0
  %v1544 = vadd.f32 0.0, %v1543
  %v1545 = vpop.f32.mrb[0].mxu0
  %1546 = vdwg.mxu0
  %1548 = vrot.lane.b32.xlu0 %v349, 96
  %v1549 = vpop.permute.xlu0 %1548
  %v1552 = vsel %vm458, %v1498, 0
  %1554 = vmatprep.subr.bf16.mxu0 0
  %1555 = vmatpush1.bf16.msra.mxu0 %v1549
  %1556 = vmatprep.subr.bf16.mxu0 0
  %1557 = vmatpush1.bf16.msra.mxu0 0
  %1558 = vmatprep.subr.bf16.mxu0 0
  %1559 = vmatpush1.bf16.msra.mxu0 0
  %1560 = vmatprep.subr.bf16.mxu0 0
  %1561 = vmatpush1.bf16.msra.mxu0 0
  %1562 = vmatprep.subr.bf16.mxu0 0
  %1563 = vmatpush1.bf16.msra.mxu0 0
  %1564 = vmatprep.subr.bf16.mxu0 0
  %1565 = vmatpush1.bf16.msra.mxu0 0
  %1566 = vmatprep.subr.bf16.mxu0 0
  %1567 = vmatpush1.bf16.msra.mxu0 0
  %1568 = vmatprep.subr.bf16.mxu0 0
  %1569 = vmatpush1.bf16.msra.mxu0 0
  %1570 = vmatprep.subr.bf16.mxu0 0
  %1571 = vmatpush1.bf16.msra.mxu0 0
  %1572 = vmatprep.subr.bf16.mxu0 0
  %1573 = vmatpush1.bf16.msra.mxu0 0
  %1574 = vmatprep.subr.bf16.mxu0 0
  %1575 = vmatpush1.bf16.msra.mxu0 0
  %1576 = vmatprep.subr.bf16.mxu0 0
  %1577 = vmatpush1.bf16.msra.mxu0 0
  %1578 = vmatprep.subr.bf16.mxu0 0
  %1579 = vmatpush1.bf16.msra.mxu0 0
  %1580 = vmatprep.subr.bf16.mxu0 0
  %1581 = vmatpush1.bf16.msra.mxu0 0
  %1582 = vmatprep.subr.bf16.mxu0 0
  %1583 = vmatpush1.bf16.msra.mxu0 0
  %1584 = vmatprep.subr.bf16.mxu0 0
  %1585 = vmatpush1.bf16.msra.mxu0 0
  %1586 = vmatprep.mubr.bf16.mxu0 0
  %1587 = vmatmul.mubr.bf16.gmra.mrb[0].mxu0 %v1552
  %v1588 = vpop.f32.mrb[0].mxu0
  %v1589 = vadd.f32 0.0, %v1588
  %v1590 = vpop.f32.mrb[0].mxu0
  %v1591 = vpop.f32.mrb[0].mxu0
  %v1592 = vadd.f32 0.0, %v1591
  %v1593 = vpop.f32.mrb[0].mxu0
  %1594 = vdwg.mxu0
  %1595 = vrot.lane.b32.xlu0 %v339, 64
  %v1596 = vpop.permute.xlu0 %1595
  %1597 = vrot.lane.b32.xlu0 %v341, 64
  %v1598 = vpop.permute.xlu0 %1597
  %v1600 = vsel %vm148, %v1596, 0
  %v1603 = vsel %vm148, %v1598, 0
  %1605 = vmatprep.subr.bf16.mxu0 0
  %1606 = vmatpush1.bf16.xpose.msra.mxu0 %v1603
  %1607 = vmatprep.subr.bf16.mxu0 0
  %1608 = vmatpush1.bf16.xpose.msra.mxu0 0
  %1609 = vmatprep.subr.bf16.mxu0 0
  %1610 = vmatpush1.bf16.xpose.msra.mxu0 0
  %1611 = vmatprep.subr.bf16.mxu0 0
  %1612 = vmatpush1.bf16.xpose.msra.mxu0 0
  %1613 = vmatprep.subr.bf16.mxu0 0
  %1614 = vmatpush1.bf16.xpose.msra.mxu0 0
  %1615 = vmatprep.subr.bf16.mxu0 0
  %1616 = vmatpush1.bf16.xpose.msra.mxu0 0
  %1617 = vmatprep.subr.bf16.mxu0 0
  %1618 = vmatpush1.bf16.xpose.msra.mxu0 0
  %1619 = vmatprep.subr.bf16.mxu0 0
  %1620 = vmatpush1.bf16.xpose.msra.mxu0 0
  %1621 = vmatprep.subr.bf16.mxu0 0
  %1622 = vmatpush1.bf16.xpose.msra.mxu0 0
  %1623 = vmatprep.subr.bf16.mxu0 0
  %1624 = vmatpush1.bf16.xpose.msra.mxu0 0
  %1625 = vmatprep.subr.bf16.mxu0 0
  %1626 = vmatpush1.bf16.xpose.msra.mxu0 0
  %1627 = vmatprep.subr.bf16.mxu0 0
  %1628 = vmatpush1.bf16.xpose.msra.mxu0 0
  %1629 = vmatprep.subr.bf16.mxu0 0
  %1630 = vmatpush1.bf16.xpose.msra.mxu0 0
  %1631 = vmatprep.subr.bf16.mxu0 0
  %1632 = vmatpush1.bf16.xpose.msra.mxu0 0
  %1633 = vmatprep.subr.bf16.mxu0 0
  %1634 = vmatpush1.bf16.xpose.msra.mxu0 0
  %1635 = vmatprep.subr.bf16.mxu0 0
  %1636 = vmatpush1.bf16.xpose.msra.mxu0 0
  %1637 = vmatprep.mubr.bf16.mxu0 0
  %1638 = vmatmul.mubr.bf16.gmra.mrb[0].mxu0 %v1600
  %v1639 = vpop.f32.mrb[0].mxu0
  %v1640 = vadd.f32 0.0, %v1639
  %v1641 = vpop.f32.mrb[0].mxu0
  %v1642 = vpop.f32.mrb[0].mxu0
  %v1643 = vadd.f32 0.0, %v1642
  %v1644 = vpop.f32.mrb[0].mxu0
  %1645 = vdwg.mxu0
  %1646 = vrot.lane.b32.xlu0 %v345, 64
  %v1647 = vpop.permute.xlu0 %1646
  %1648 = vrot.lane.b32.xlu0 %v347, 64
  %v1649 = vpop.permute.xlu0 %1648
  %v1651 = vsel %vm148, %v1647, 0
  %v1654 = vsel %vm148, %v1649, 0
  %1656 = vmatprep.subr.bf16.mxu0 0
  %1657 = vmatpush1.bf16.xpose.msra.mxu0 %v1654
  %1658 = vmatprep.subr.bf16.mxu0 0
  %1659 = vmatpush1.bf16.xpose.msra.mxu0 0
  %1660 = vmatprep.subr.bf16.mxu0 0
  %1661 = vmatpush1.bf16.xpose.msra.mxu0 0
  %1662 = vmatprep.subr.bf16.mxu0 0
  %1663 = vmatpush1.bf16.xpose.msra.mxu0 0
  %1664 = vmatprep.subr.bf16.mxu0 0
  %1665 = vmatpush1.bf16.xpose.msra.mxu0 0
  %1666 = vmatprep.subr.bf16.mxu0 0
  %1667 = vmatpush1.bf16.xpose.msra.mxu0 0
  %1668 = vmatprep.subr.bf16.mxu0 0
  %1669 = vmatpush1.bf16.xpose.msra.mxu0 0
  %1670 = vmatprep.subr.bf16.mxu0 0
  %1671 = vmatpush1.bf16.xpose.msra.mxu0 0
  %1672 = vmatprep.subr.bf16.mxu0 0
  %1673 = vmatpush1.bf16.xpose.msra.mxu0 0
  %1674 = vmatprep.subr.bf16.mxu0 0
  %1675 = vmatpush1.bf16.xpose.msra.mxu0 0
  %1676 = vmatprep.subr.bf16.mxu0 0
  %1677 = vmatpush1.bf16.xpose.msra.mxu0 0
  %1678 = vmatprep.subr.bf16.mxu0 0
  %1679 = vmatpush1.bf16.xpose.msra.mxu0 0
  %1680 = vmatprep.subr.bf16.mxu0 0
  %1681 = vmatpush1.bf16.xpose.msra.mxu0 0
  %1682 = vmatprep.subr.bf16.mxu0 0
  %1683 = vmatpush1.bf16.xpose.msra.mxu0 0
  %1684 = vmatprep.subr.bf16.mxu0 0
  %1685 = vmatpush1.bf16.xpose.msra.mxu0 0
  %1686 = vmatprep.subr.bf16.mxu0 0
  %1687 = vmatpush1.bf16.xpose.msra.mxu0 0
  %1688 = vmatprep.mubr.bf16.mxu0 0
  %1689 = vmatmul.mubr.bf16.gmra.mrb[0].mxu0 %v1651
  %v1690 = vpop.f32.mrb[0].mxu0
  %v1691 = vadd.f32 0.0, %v1690
  %v1692 = vpop.f32.mrb[0].mxu0
  %v1693 = vpop.f32.mrb[0].mxu0
  %v1694 = vadd.f32 0.0, %v1693
  %v1695 = vpop.f32.mrb[0].mxu0
  %1696 = vdwg.mxu0
  %vm1697 = vcmp.gt.f32.partialorder %v1640, 0.0
  %vm1698 = vcmp.gt.f32.partialorder %v1643, 0.0
  %vm1699 = vcmp.gt.f32.partialorder %v1691, 0.0
  %vm1700 = vcmp.gt.f32.partialorder %v1694, 0.0
  %v1701 = vmul.f32 %v1640, 0.2
  %v1702 = vmul.f32 %v1643, 0.2
  %v1703 = vmul.f32 %v1691, 0.2
  %v1704 = vmul.f32 %v1694, 0.2
  %v1705 = vsel %vm1697, %v1640, %v1701
  %v1706 = vsel %vm1698, %v1643, %v1702
  %v1707 = vsel %vm1699, %v1691, %v1703
  %v1708 = vsel %vm1700, %v1694, %v1704
  %v1709 = vpack.c.bf16 %v1706, %v1705
  %v1710 = vpack.c.bf16 %v1708, %v1707
  %1711 = vrot.lane.b32.xlu0 %v343, 64
  %v1712 = vpop.permute.xlu0 %1711
  %v1715 = vsel %vm458, %v1709, 0
  %1717 = vmatprep.subr.bf16.mxu0 0
  %1718 = vmatpush1.bf16.msra.mxu0 %v1712
  %1719 = vmatprep.subr.bf16.mxu0 0
  %1720 = vmatpush1.bf16.msra.mxu0 0
  %1721 = vmatprep.subr.bf16.mxu0 0
  %1722 = vmatpush1.bf16.msra.mxu0 0
  %1723 = vmatprep.subr.bf16.mxu0 0
  %1724 = vmatpush1.bf16.msra.mxu0 0
  %1725 = vmatprep.subr.bf16.mxu0 0
  %1726 = vmatpush1.bf16.msra.mxu0 0
  %1727 = vmatprep.subr.bf16.mxu0 0
  %1728 = vmatpush1.bf16.msra.mxu0 0
  %1729 = vmatprep.subr.bf16.mxu0 0
  %1730 = vmatpush1.bf16.msra.mxu0 0
  %1731 = vmatprep.subr.bf16.mxu0 0
  %1732 = vmatpush1.bf16.msra.mxu0 0
  %1733 = vmatprep.subr.bf16.mxu0 0
  %1734 = vmatpush1.bf16.msra.mxu0 0
  %1735 = vmatprep.subr.bf16.mxu0 0
  %1736 = vmatpush1.bf16.msra.mxu0 0
  %1737 = vmatprep.subr.bf16.mxu0 0
  %1738 = vmatpush1.bf16.msra.mxu0 0
  %1739 = vmatprep.subr.bf16.mxu0 0
  %1740 = vmatpush1.bf16.msra.mxu0 0
  %1741 = vmatprep.subr.bf16.mxu0 0
  %1742 = vmatpush1.bf16.msra.mxu0 0
  %1743 = vmatprep.subr.bf16.mxu0 0
  %1744 = vmatpush1.bf16.msra.mxu0 0
  %1745 = vmatprep.subr.bf16.mxu0 0
  %1746 = vmatpush1.bf16.msra.mxu0 0
  %1747 = vmatprep.subr.bf16.mxu0 0
  %1748 = vmatpush1.bf16.msra.mxu0 0
  %1749 = vmatprep.mubr.bf16.mxu0 0
  %1750 = vmatmul.mubr.bf16.gmra.mrb[0].mxu0 %v1715
  %v1751 = vpop.f32.mrb[0].mxu0
  %v1752 = vadd.f32 0.0, %v1751
  %v1753 = vpop.f32.mrb[0].mxu0
  %v1754 = vpop.f32.mrb[0].mxu0
  %v1755 = vadd.f32 0.0, %v1754
  %v1756 = vpop.f32.mrb[0].mxu0
  %1757 = vdwg.mxu0
  %1758 = vrot.lane.b32.xlu0 %v349, 64
  %v1759 = vpop.permute.xlu0 %1758
  %v1762 = vsel %vm458, %v1710, 0
  %1764 = vmatprep.subr.bf16.mxu0 0
  %1765 = vmatpush1.bf16.msra.mxu0 %v1759
  %1766 = vmatprep.subr.bf16.mxu0 0
  %1767 = vmatpush1.bf16.msra.mxu0 0
  %1768 = vmatprep.subr.bf16.mxu0 0
  %1769 = vmatpush1.bf16.msra.mxu0 0
  %1770 = vmatprep.subr.bf16.mxu0 0
  %1771 = vmatpush1.bf16.msra.mxu0 0
  %1772 = vmatprep.subr.bf16.mxu0 0
  %1773 = vmatpush1.bf16.msra.mxu0 0
  %1774 = vmatprep.subr.bf16.mxu0 0
  %1775 = vmatpush1.bf16.msra.mxu0 0
  %1776 = vmatprep.subr.bf16.mxu0 0
  %1777 = vmatpush1.bf16.msra.mxu0 0
  %1778 = vmatprep.subr.bf16.mxu0 0
  %1779 = vmatpush1.bf16.msra.mxu0 0
  %1780 = vmatprep.subr.bf16.mxu0 0
  %1781 = vmatpush1.bf16.msra.mxu0 0
  %1782 = vmatprep.subr.bf16.mxu0 0
  %1783 = vmatpush1.bf16.msra.mxu0 0
  %1784 = vmatprep.subr.bf16.mxu0 0
  %1785 = vmatpush1.bf16.msra.mxu0 0
  %1786 = vmatprep.subr.bf16.mxu0 0
  %1787 = vmatpush1.bf16.msra.mxu0 0
  %1788 = vmatprep.subr.bf16.mxu0 0
  %1789 = vmatpush1.bf16.msra.mxu0 0
  %1790 = vmatprep.subr.bf16.mxu0 0
  %1791 = vmatpush1.bf16.msra.mxu0 0
  %1792 = vmatprep.subr.bf16.mxu0 0
  %1793 = vmatpush1.bf16.msra.mxu0 0
  %1794 = vmatprep.subr.bf16.mxu0 0
  %1795 = vmatpush1.bf16.msra.mxu0 0
  %1796 = vmatprep.mubr.bf16.mxu0 0
  %1797 = vmatmul.mubr.bf16.gmra.mrb[0].mxu0 %v1762
  %v1798 = vpop.f32.mrb[0].mxu0
  %v1799 = vadd.f32 0.0, %v1798
  %v1800 = vpop.f32.mrb[0].mxu0
  %v1801 = vpop.f32.mrb[0].mxu0
  %v1802 = vadd.f32 0.0, %v1801
  %v1803 = vpop.f32.mrb[0].mxu0
  %1804 = vdwg.mxu0
  %1805 = vrot.lane.b32.xlu0 %v339, 32
  %v1806 = vpop.permute.xlu0 %1805
  %1807 = vrot.lane.b32.xlu0 %v341, 32
  %v1808 = vpop.permute.xlu0 %1807
  %v1810 = vsel %vm148, %v1806, 0
  %v1813 = vsel %vm148, %v1808, 0
  %1815 = vmatprep.subr.bf16.mxu0 0
  %1816 = vmatpush1.bf16.xpose.msra.mxu0 %v1813
  %1817 = vmatprep.subr.bf16.mxu0 0
  %1818 = vmatpush1.bf16.xpose.msra.mxu0 0
  %1819 = vmatprep.subr.bf16.mxu0 0
  %1820 = vmatpush1.bf16.xpose.msra.mxu0 0
  %1821 = vmatprep.subr.bf16.mxu0 0
  %1822 = vmatpush1.bf16.xpose.msra.mxu0 0
  %1823 = vmatprep.subr.bf16.mxu0 0
  %1824 = vmatpush1.bf16.xpose.msra.mxu0 0
  %1825 = vmatprep.subr.bf16.mxu0 0
  %1826 = vmatpush1.bf16.xpose.msra.mxu0 0
  %1827 = vmatprep.subr.bf16.mxu0 0
  %1828 = vmatpush1.bf16.xpose.msra.mxu0 0
  %1829 = vmatprep.subr.bf16.mxu0 0
  %1830 = vmatpush1.bf16.xpose.msra.mxu0 0
  %1831 = vmatprep.subr.bf16.mxu0 0
  %1832 = vmatpush1.bf16.xpose.msra.mxu0 0
  %1833 = vmatprep.subr.bf16.mxu0 0
  %1834 = vmatpush1.bf16.xpose.msra.mxu0 0
  %1835 = vmatprep.subr.bf16.mxu0 0
  %1836 = vmatpush1.bf16.xpose.msra.mxu0 0
  %1837 = vmatprep.subr.bf16.mxu0 0
  %1838 = vmatpush1.bf16.xpose.msra.mxu0 0
  %1839 = vmatprep.subr.bf16.mxu0 0
  %1840 = vmatpush1.bf16.xpose.msra.mxu0 0
  %1841 = vmatprep.subr.bf16.mxu0 0
  %1842 = vmatpush1.bf16.xpose.msra.mxu0 0
  %1843 = vmatprep.subr.bf16.mxu0 0
  %1844 = vmatpush1.bf16.xpose.msra.mxu0 0
  %1845 = vmatprep.subr.bf16.mxu0 0
  %1846 = vmatpush1.bf16.xpose.msra.mxu0 0
  %1847 = vmatprep.mubr.bf16.mxu0 0
  %1848 = vmatmul.mubr.bf16.gmra.mrb[0].mxu0 %v1810
  %v1849 = vpop.f32.mrb[0].mxu0
  %v1850 = vadd.f32 0.0, %v1849
  %v1851 = vpop.f32.mrb[0].mxu0
  %v1852 = vpop.f32.mrb[0].mxu0
  %v1853 = vadd.f32 0.0, %v1852
  %v1854 = vpop.f32.mrb[0].mxu0
  %1855 = vdwg.mxu0
  %1856 = vrot.lane.b32.xlu0 %v345, 32
  %v1857 = vpop.permute.xlu0 %1856
  %1858 = vrot.lane.b32.xlu0 %v347, 32
  %v1859 = vpop.permute.xlu0 %1858
  %v1861 = vsel %vm148, %v1857, 0
  %v1864 = vsel %vm148, %v1859, 0
  %1866 = vmatprep.subr.bf16.mxu0 0
  %1867 = vmatpush1.bf16.xpose.msra.mxu0 %v1864
  %1868 = vmatprep.subr.bf16.mxu0 0
  %1869 = vmatpush1.bf16.xpose.msra.mxu0 0
  %1870 = vmatprep.subr.bf16.mxu0 0
  %1871 = vmatpush1.bf16.xpose.msra.mxu0 0
  %1872 = vmatprep.subr.bf16.mxu0 0
  %1873 = vmatpush1.bf16.xpose.msra.mxu0 0
  %1874 = vmatprep.subr.bf16.mxu0 0
  %1875 = vmatpush1.bf16.xpose.msra.mxu0 0
  %1876 = vmatprep.subr.bf16.mxu0 0
  %1877 = vmatpush1.bf16.xpose.msra.mxu0 0
  %1878 = vmatprep.subr.bf16.mxu0 0
  %1879 = vmatpush1.bf16.xpose.msra.mxu0 0
  %1880 = vmatprep.subr.bf16.mxu0 0
  %1881 = vmatpush1.bf16.xpose.msra.mxu0 0
  %1882 = vmatprep.subr.bf16.mxu0 0
  %1883 = vmatpush1.bf16.xpose.msra.mxu0 0
  %1884 = vmatprep.subr.bf16.mxu0 0
  %1885 = vmatpush1.bf16.xpose.msra.mxu0 0
  %1886 = vmatprep.subr.bf16.mxu0 0
  %1887 = vmatpush1.bf16.xpose.msra.mxu0 0
  %1888 = vmatprep.subr.bf16.mxu0 0
  %1889 = vmatpush1.bf16.xpose.msra.mxu0 0
  %1890 = vmatprep.subr.bf16.mxu0 0
  %1891 = vmatpush1.bf16.xpose.msra.mxu0 0
  %1892 = vmatprep.subr.bf16.mxu0 0
  %1893 = vmatpush1.bf16.xpose.msra.mxu0 0
  %1894 = vmatprep.subr.bf16.mxu0 0
  %1895 = vmatpush1.bf16.xpose.msra.mxu0 0
  %1896 = vmatprep.subr.bf16.mxu0 0
  %1897 = vmatpush1.bf16.xpose.msra.mxu0 0
  %1898 = vmatprep.mubr.bf16.mxu0 0
  %1899 = vmatmul.mubr.bf16.gmra.mrb[0].mxu0 %v1861
  %v1900 = vpop.f32.mrb[0].mxu0
  %v1901 = vadd.f32 0.0, %v1900
  %v1902 = vpop.f32.mrb[0].mxu0
  %v1903 = vpop.f32.mrb[0].mxu0
  %v1904 = vadd.f32 0.0, %v1903
  %v1905 = vpop.f32.mrb[0].mxu0
  %1906 = vdwg.mxu0
  %vm1907 = vcmp.gt.f32.partialorder %v1850, 0.0
  %vm1908 = vcmp.gt.f32.partialorder %v1853, 0.0
  %vm1909 = vcmp.gt.f32.partialorder %v1901, 0.0
  %vm1910 = vcmp.gt.f32.partialorder %v1904, 0.0
  %v1911 = vmul.f32 %v1850, 0.2
  %v1912 = vmul.f32 %v1853, 0.2
  %v1913 = vmul.f32 %v1901, 0.2
  %v1914 = vmul.f32 %v1904, 0.2
  %v1915 = vsel %vm1907, %v1850, %v1911
  %v1916 = vsel %vm1908, %v1853, %v1912
  %v1917 = vsel %vm1909, %v1901, %v1913
  %v1918 = vsel %vm1910, %v1904, %v1914
  %v1919 = vpack.c.bf16 %v1916, %v1915
  %v1920 = vpack.c.bf16 %v1918, %v1917
  %1921 = vrot.lane.b32.xlu0 %v343, 32
  %v1922 = vpop.permute.xlu0 %1921
  %v1925 = vsel %vm458, %v1919, 0
  %1927 = vmatprep.subr.bf16.mxu0 0
  %1928 = vmatpush1.bf16.msra.mxu0 %v1922
  %1929 = vmatprep.subr.bf16.mxu0 0
  %1930 = vmatpush1.bf16.msra.mxu0 0
  %1931 = vmatprep.subr.bf16.mxu0 0
  %1932 = vmatpush1.bf16.msra.mxu0 0
  %1933 = vmatprep.subr.bf16.mxu0 0
  %1934 = vmatpush1.bf16.msra.mxu0 0
  %1935 = vmatprep.subr.bf16.mxu0 0
  %1936 = vmatpush1.bf16.msra.mxu0 0
  %1937 = vmatprep.subr.bf16.mxu0 0
  %1938 = vmatpush1.bf16.msra.mxu0 0
  %1939 = vmatprep.subr.bf16.mxu0 0
  %1940 = vmatpush1.bf16.msra.mxu0 0
  %1941 = vmatprep.subr.bf16.mxu0 0
  %1942 = vmatpush1.bf16.msra.mxu0 0
  %1943 = vmatprep.subr.bf16.mxu0 0
  %1944 = vmatpush1.bf16.msra.mxu0 0
  %1945 = vmatprep.subr.bf16.mxu0 0
  %1946 = vmatpush1.bf16.msra.mxu0 0
  %1947 = vmatprep.subr.bf16.mxu0 0
  %1948 = vmatpush1.bf16.msra.mxu0 0
  %1949 = vmatprep.subr.bf16.mxu0 0
  %1950 = vmatpush1.bf16.msra.mxu0 0
  %1951 = vmatprep.subr.bf16.mxu0 0
  %1952 = vmatpush1.bf16.msra.mxu0 0
  %1953 = vmatprep.subr.bf16.mxu0 0
  %1954 = vmatpush1.bf16.msra.mxu0 0
  %1955 = vmatprep.subr.bf16.mxu0 0
  %1956 = vmatpush1.bf16.msra.mxu0 0
  %1957 = vmatprep.subr.bf16.mxu0 0
  %1958 = vmatpush1.bf16.msra.mxu0 0
  %1959 = vmatprep.mubr.bf16.mxu0 0
  %1960 = vmatmul.mubr.bf16.gmra.mrb[0].mxu0 %v1925
  %v1961 = vpop.f32.mrb[0].mxu0
  %v1962 = vadd.f32 0.0, %v1961
  %v1963 = vpop.f32.mrb[0].mxu0
  %v1964 = vpop.f32.mrb[0].mxu0
  %v1965 = vadd.f32 0.0, %v1964
  %v1966 = vpop.f32.mrb[0].mxu0
  %1967 = vdwg.mxu0
  %1968 = vrot.lane.b32.xlu0 %v349, 32
  %v1969 = vpop.permute.xlu0 %1968
  %v1972 = vsel %vm458, %v1920, 0
  %1974 = vmatprep.subr.bf16.mxu0 0
  %1975 = vmatpush1.bf16.msra.mxu0 %v1969
  %1976 = vmatprep.subr.bf16.mxu0 0
  %1977 = vmatpush1.bf16.msra.mxu0 0
  %1978 = vmatprep.subr.bf16.mxu0 0
  %1979 = vmatpush1.bf16.msra.mxu0 0
  %1980 = vmatprep.subr.bf16.mxu0 0
  %1981 = vmatpush1.bf16.msra.mxu0 0
  %1982 = vmatprep.subr.bf16.mxu0 0
  %1983 = vmatpush1.bf16.msra.mxu0 0
  %1984 = vmatprep.subr.bf16.mxu0 0
  %1985 = vmatpush1.bf16.msra.mxu0 0
  %1986 = vmatprep.subr.bf16.mxu0 0
  %1987 = vmatpush1.bf16.msra.mxu0 0
  %1988 = vmatprep.subr.bf16.mxu0 0
  %1989 = vmatpush1.bf16.msra.mxu0 0
  %1990 = vmatprep.subr.bf16.mxu0 0
  %1991 = vmatpush1.bf16.msra.mxu0 0
  %1992 = vmatprep.subr.bf16.mxu0 0
  %1993 = vmatpush1.bf16.msra.mxu0 0
  %1994 = vmatprep.subr.bf16.mxu0 0
  %1995 = vmatpush1.bf16.msra.mxu0 0
  %1996 = vmatprep.subr.bf16.mxu0 0
  %1997 = vmatpush1.bf16.msra.mxu0 0
  %1998 = vmatprep.subr.bf16.mxu0 0
  %1999 = vmatpush1.bf16.msra.mxu0 0
  %2000 = vmatprep.subr.bf16.mxu0 0
  %2001 = vmatpush1.bf16.msra.mxu0 0
  %2002 = vmatprep.subr.bf16.mxu0 0
  %2003 = vmatpush1.bf16.msra.mxu0 0
  %2004 = vmatprep.subr.bf16.mxu0 0
  %2005 = vmatpush1.bf16.msra.mxu0 0
  %2006 = vmatprep.mubr.bf16.mxu0 0
  %2007 = vmatmul.mubr.bf16.gmra.mrb[0].mxu0 %v1972
  %v2008 = vpop.f32.mrb[0].mxu0
  %v2009 = vadd.f32 0.0, %v2008
  %v2010 = vpop.f32.mrb[0].mxu0
  %v2011 = vpop.f32.mrb[0].mxu0
  %v2012 = vadd.f32 0.0, %v2011
  %v2013 = vpop.f32.mrb[0].mxu0
  %2014 = vdwg.mxu0
  %2019 = vrot.lane.b32.xlu0 %v709, 32
  %v2020 = vpop.permute.xlu0 %2019
  %2021 = vrot.lane.b32.xlu0 %v712, 32
  %v2022 = vpop.permute.xlu0 %2021
  %2023 = vrot.lane.b32.xlu0 %v757, 32
  %v2024 = vpop.permute.xlu0 %2023
  %2025 = vrot.lane.b32.xlu0 %v760, 32
  %v2026 = vpop.permute.xlu0 %2025
  %2035 = vrot.lane.b32.xlu0 %v920, 64
  %v2036 = vpop.permute.xlu0 %2035
  %2037 = vrot.lane.b32.xlu0 %v923, 64
  %v2038 = vpop.permute.xlu0 %2037
  %2039 = vrot.lane.b32.xlu0 %v967, 64
  %v2040 = vpop.permute.xlu0 %2039
  %2041 = vrot.lane.b32.xlu0 %v970, 64
  %v2042 = vpop.permute.xlu0 %2041
  %2051 = vrot.lane.b32.xlu0 %v1130, 96
  %v2052 = vpop.permute.xlu0 %2051
  %2053 = vrot.lane.b32.xlu0 %v1133, 96
  %v2054 = vpop.permute.xlu0 %2053
  %2055 = vrot.lane.b32.xlu0 %v1177, 96
  %v2056 = vpop.permute.xlu0 %2055
  %2057 = vrot.lane.b32.xlu0 %v1180, 96
  %v2058 = vpop.permute.xlu0 %2057
  %2067 = vrot.lane.b32.xlu0 %v1541, 32
  %v2068 = vpop.permute.xlu0 %2067
  %2069 = vrot.lane.b32.xlu0 %v1544, 32
  %v2070 = vpop.permute.xlu0 %2069
  %2071 = vrot.lane.b32.xlu0 %v1589, 32
  %v2072 = vpop.permute.xlu0 %2071
  %2073 = vrot.lane.b32.xlu0 %v1592, 32
  %v2074 = vpop.permute.xlu0 %2073
  %2083 = vrot.lane.b32.xlu0 %v1752, 64
  %v2084 = vpop.permute.xlu0 %2083
  %2085 = vrot.lane.b32.xlu0 %v1755, 64
  %v2086 = vpop.permute.xlu0 %2085
  %2087 = vrot.lane.b32.xlu0 %v1799, 64
  %v2088 = vpop.permute.xlu0 %2087
  %2089 = vrot.lane.b32.xlu0 %v1802, 64
  %v2090 = vpop.permute.xlu0 %2089
  %2099 = vrot.lane.b32.xlu0 %v1962, 96
  %v2100 = vpop.permute.xlu0 %2099
  %2101 = vrot.lane.b32.xlu0 %v1965, 96
  %v2102 = vpop.permute.xlu0 %2101
  %2103 = vrot.lane.b32.xlu0 %v2009, 96
  %v2104 = vpop.permute.xlu0 %2103
  %2105 = vrot.lane.b32.xlu0 %v2012, 96
  %v2106 = vpop.permute.xlu0 %2105
  %v2111 = vsel %vm148, %v497, %v2020
  %v2112 = vsel %vm148, %v500, %v2022
  %v2113 = vsel %vm148, %v541, %v2024
  %v2114 = vsel %vm148, %v544, %v2026
  %vm2115 = vcmask 523264
  %v2116 = vsel %vm2115, %v2111, %v2036
  %v2117 = vsel %vm2115, %v2112, %v2038
  %v2118 = vsel %vm2115, %v2113, %v2040
  %v2119 = vsel %vm2115, %v2114, %v2042
  %vm2120 = vcmask 785408
  %v2121 = vsel %vm2120, %v2116, %v2052
  %v2122 = vsel %vm2120, %v2117, %v2054
  %v2123 = vsel %vm2120, %v2118, %v2056
  %v2124 = vsel %vm2120, %v2119, %v2058
  %v2125 = vsel %vm148, %v1329, %v2068
  %v2126 = vsel %vm148, %v1332, %v2070
  %v2127 = vsel %vm148, %v1373, %v2072
  %v2128 = vsel %vm148, %v1376, %v2074
  %v2129 = vsel %vm2115, %v2125, %v2084
  %v2130 = vsel %vm2115, %v2126, %v2086
  %v2131 = vsel %vm2115, %v2127, %v2088
  %v2132 = vsel %vm2115, %v2128, %v2090
  %v2133 = vsel %vm2120, %v2129, %v2100
  %v2134 = vsel %vm2120, %v2130, %v2102
  %v2135 = vsel %vm2120, %v2131, %v2104
  %v2136 = vsel %vm2120, %v2132, %v2106
  %v2137 = vpack.c.bf16 %v2122, %v2121
  %v2138 = vpack.c.bf16 %v2134, %v2133
  %v2139 = vpack.c.bf16 %v2124, %v2123
  %v2140 = vpack.c.bf16 %v2136, %v2135
  %v2141 = vld [vmem:[%s3] sm:$0xf]
  %v2142 = vld [vmem:[%s3 + $0x4] sm:$0xf]
  %v2143 = vld [vmem:[%s3 + $0x8] sm:$0xf]
  %v2144 = vld [vmem:[%s3 + $0xc] sm:$0xf]
  %v2145 = vld [vmem:[%s3 + $0x10] sm:$0xf]
  %v2146 = vld [vmem:[%s3 + $0x14] sm:$0xf]
  %v2147 = vld [vmem:[%s3 + $0x18] sm:$0xf]
  %v2148 = vld [vmem:[%s3 + $0x1c] sm:$0xf]
  %v2149 = vld [vmem:[%s3 + $0x20] sm:$0xf]
  %v2150 = vld [vmem:[%s3 + $0x24] sm:$0xf]
  %v2151 = vld [vmem:[%s3 + $0x28] sm:$0xf]
  %v2152 = vld [vmem:[%s3 + $0x2c] sm:$0xf]
  %v2153 = vld [vmem:[%s3 + $0x30] sm:$0xf]
  %v2154 = vld [vmem:[%s3 + $0x34] sm:$0xf]
  %v2155 = vld [vmem:[%s3 + $0x38] sm:$0xf]
  %v2156 = vld [vmem:[%s3 + $0x3c] sm:$0xf]
  %v2157 = vld [vmem:[%s3 + $0x40] sm:$0xf]
  %v2158 = vld [vmem:[%s3 + $0x44] sm:$0xf]
  %v2159 = vld [vmem:[%s3 + $0x48] sm:$0xf]
  %v2160 = vld [vmem:[%s3 + $0x4c] sm:$0xf]
  %v2161 = vld [vmem:[%s3 + $0x50] sm:$0xf]
  %v2162 = vld [vmem:[%s3 + $0x54] sm:$0xf]
  %v2163 = vld [vmem:[%s3 + $0x58] sm:$0xf]
  %v2164 = vld [vmem:[%s3 + $0x5c] sm:$0xf]
  %v2165 = vld [vmem:[%s3 + $0x60] sm:$0xf]
  %v2166 = vld [vmem:[%s3 + $0x64] sm:$0xf]
  %v2167 = vld [vmem:[%s3 + $0x68] sm:$0xf]
  %v2168 = vld [vmem:[%s3 + $0x6c] sm:$0xf]
  %v2169 = vld [vmem:[%s3 + $0x70] sm:$0xf]
  %v2170 = vld [vmem:[%s3 + $0x74] sm:$0xf]
  %v2171 = vld [vmem:[%s3 + $0x78] sm:$0xf]
  %v2172 = vld [vmem:[%s3 + $0x7c] sm:$0xf]
  %v2173 = vld [vmem:[%s4] sm:$0x1]
  %v2175 = vlaneseq
  %v2176 = vshrl.u32 %v2175, 7
  %v2177 = vsub.s32 0, %v2176
  %v2178 = vrot.slane %v2173, %v2177
  %v2212 = vunpack.c.l.b16 %v2141
  %v2213 = vunpack.c.l.b16 %v2142
  %v2214 = vunpack.c.l.b16 %v2143
  %v2215 = vunpack.c.l.b16 %v2144
  %v2216 = vunpack.c.l.b16 %v2145
  %v2217 = vunpack.c.l.b16 %v2146
  %v2218 = vunpack.c.l.b16 %v2147
  %v2219 = vunpack.c.l.b16 %v2148
  %v2220 = vunpack.c.l.b16 %v2149
  %v2221 = vunpack.c.l.b16 %v2150
  %v2222 = vunpack.c.l.b16 %v2151
  %v2223 = vunpack.c.l.b16 %v2152
  %v2224 = vunpack.c.l.b16 %v2153
  %v2225 = vunpack.c.l.b16 %v2154
  %v2226 = vunpack.c.l.b16 %v2155
  %v2227 = vunpack.c.l.b16 %v2156
  %v2228 = vunpack.c.l.b16 %v2157
  %v2229 = vunpack.c.l.b16 %v2158
  %v2230 = vunpack.c.l.b16 %v2159
  %v2231 = vunpack.c.l.b16 %v2160
  %v2232 = vunpack.c.l.b16 %v2161
  %v2233 = vunpack.c.l.b16 %v2162
  %v2234 = vunpack.c.l.b16 %v2163
  %v2235 = vunpack.c.l.b16 %v2164
  %v2236 = vunpack.c.l.b16 %v2165
  %v2237 = vunpack.c.l.b16 %v2166
  %v2238 = vunpack.c.l.b16 %v2167
  %v2239 = vunpack.c.l.b16 %v2168
  %v2240 = vunpack.c.l.b16 %v2169
  %v2241 = vunpack.c.l.b16 %v2170
  %v2242 = vunpack.c.l.b16 %v2171
  %v2243 = vunpack.c.l.b16 %v2172
  %v2244 = vpack.c.b16 %v2213, %v2212
  %v2245 = vpack.c.b16 %v2215, %v2214
  %v2246 = vpack.c.b16 %v2217, %v2216
  %v2247 = vpack.c.b16 %v2219, %v2218
  %v2248 = vpack.c.b16 %v2221, %v2220
  %v2249 = vpack.c.b16 %v2223, %v2222
  %v2250 = vpack.c.b16 %v2225, %v2224
  %v2251 = vpack.c.b16 %v2227, %v2226
  %v2252 = vpack.c.b16 %v2229, %v2228
  %v2253 = vpack.c.b16 %v2231, %v2230
  %v2254 = vpack.c.b16 %v2233, %v2232
  %v2255 = vpack.c.b16 %v2235, %v2234
  %v2256 = vpack.c.b16 %v2237, %v2236
  %v2257 = vpack.c.b16 %v2239, %v2238
  %v2258 = vpack.c.b16 %v2241, %v2240
  %v2259 = vpack.c.b16 %v2243, %v2242
  %2276 = vmatprep.subr.bf16.mxu0 0
  %2277 = vmatpush1.bf16.msra.mxu0 %v2244
  %2278 = vmatprep.subr.bf16.mxu0 0
  %2279 = vmatpush1.bf16.msra.mxu0 %v2245
  %2280 = vmatprep.subr.bf16.mxu0 0
  %2281 = vmatpush1.bf16.msra.mxu0 %v2246
  %2282 = vmatprep.subr.bf16.mxu0 0
  %2283 = vmatpush1.bf16.msra.mxu0 %v2247
  %2284 = vmatprep.subr.bf16.mxu0 0
  %2285 = vmatpush1.bf16.msra.mxu0 %v2248
  %2286 = vmatprep.subr.bf16.mxu0 0
  %2287 = vmatpush1.bf16.msra.mxu0 %v2249
  %2288 = vmatprep.subr.bf16.mxu0 0
  %2289 = vmatpush1.bf16.msra.mxu0 %v2250
  %2290 = vmatprep.subr.bf16.mxu0 0
  %2291 = vmatpush1.bf16.msra.mxu0 %v2251
  %2292 = vmatprep.subr.bf16.mxu0 0
  %2293 = vmatpush1.bf16.msra.mxu0 %v2252
  %2294 = vmatprep.subr.bf16.mxu0 0
  %2295 = vmatpush1.bf16.msra.mxu0 %v2253
  %2296 = vmatprep.subr.bf16.mxu0 0
  %2297 = vmatpush1.bf16.msra.mxu0 %v2254
  %2298 = vmatprep.subr.bf16.mxu0 0
  %2299 = vmatpush1.bf16.msra.mxu0 %v2255
  %2300 = vmatprep.subr.bf16.mxu0 0
  %2301 = vmatpush1.bf16.msra.mxu0 %v2256
  %2302 = vmatprep.subr.bf16.mxu0 0
  %2303 = vmatpush1.bf16.msra.mxu0 %v2257
  %2304 = vmatprep.subr.bf16.mxu0 0
  %2305 = vmatpush1.bf16.msra.mxu0 %v2258
  %2306 = vmatprep.subr.bf16.mxu0 0
  %2307 = vmatpush1.bf16.msra.mxu0 %v2259
  %2308 = vmatprep.mubr.bf16.mxu0 %v2138
  %2309 = vmatmul.mubr.bf16.gmra.mrb[0].mxu0 %v2137
  %v2310 = vpop.f32.mrb[0].mxu0
  %v2311 = vadd.f32 %v2178, %v2310
  %v2312 = vpop.f32.mrb[0].mxu0
  %v2313 = vpop.f32.mrb[0].mxu0
  %v2314 = vadd.f32 %v2178, %v2313
  %v2315 = vpop.f32.mrb[0].mxu0
  %2316 = vmatprep.mubr.bf16.mxu0 %v2140
  %2317 = vmatmul.mubr.bf16.gmra.mrb[0].mxu0 %v2139
  %v2318 = vpop.f32.mrb[0].mxu0
  %v2319 = vadd.f32 %v2178, %v2318
  %v2320 = vpop.f32.mrb[0].mxu0
  %v2321 = vpop.f32.mrb[0].mxu0
  %v2322 = vadd.f32 %v2178, %v2321
  %v2323 = vpop.f32.mrb[0].mxu0
  %2324 = vdwg.mxu0
  %v2325 = vmax.f32 %v2311, 0.0
  %v2326 = vmax.f32 %v2314, 0.0
  %v2327 = vmax.f32 %v2319, 0.0
  %v2328 = vmax.f32 %v2322, 0.0
  %v2329 = vld [vmem:[%s5] sm:$0xf]
  %v2330 = vld [vmem:[%s5 + $0x4] sm:$0xf]
  %v2331 = vld [vmem:[%s5 + $0x8] sm:$0xf]
  %v2332 = vld [vmem:[%s5 + $0xc] sm:$0xf]
  %v2333 = vpack.c.bf16 %v2326, %v2325
  %v2334 = vpack.c.bf16 %v2328, %v2327
  %v2335 = vld [vmem:[%s6] sm:$0xf]
  %v2336 = vld [vmem:[%s6 + $0x4] sm:$0xf]
  %v2337 = vld [vmem:[%s6 + $0x8] sm:$0xf]
  %v2338 = vld [vmem:[%s6 + $0xc] sm:$0xf]
  %v2343 = vunpack.c.l.b16 %v2335
  %v2344 = vunpack.c.l.b16 %v2336
  %v2345 = vunpack.c.l.b16 %v2337
  %v2346 = vunpack.c.l.b16 %v2338
  %v2347 = vpack.c.b16 %v2344, %v2343
  %v2348 = vpack.c.b16 %v2346, %v2345
  %v2352 = vsel %vm148, %v2333, 0
  %v2355 = vsel %vm148, %v2334, 0
  %2357 = vmatprep.subr.bf16.mxu0 0
  %2358 = vmatpush1.bf16.msra.mxu0 %v2347
  %2359 = vmatprep.subr.bf16.mxu0 0
  %2360 = vmatpush1.bf16.msra.mxu0 %v2348
  %2361 = vmatprep.subr.bf16.mxu0 0
  %2362 = vmatpush1.bf16.msra.mxu0 0
  %2363 = vmatprep.subr.bf16.mxu0 0
  %2364 = vmatpush1.bf16.msra.mxu0 0
  %2365 = vmatprep.subr.bf16.mxu0 0
  %2366 = vmatpush1.bf16.msra.mxu0 0
  %2367 = vmatprep.subr.bf16.mxu0 0
  %2368 = vmatpush1.bf16.msra.mxu0 0
  %2369 = vmatprep.subr.bf16.mxu0 0
  %2370 = vmatpush1.bf16.msra.mxu0 0
  %2371 = vmatprep.subr.bf16.mxu0 0
  %2372 = vmatpush1.bf16.msra.mxu0 0
  %2373 = vmatprep.subr.bf16.mxu0 0
  %2374 = vmatpush1.bf16.msra.mxu0 0
  %2375 = vmatprep.subr.bf16.mxu0 0
  %2376 = vmatpush1.bf16.msra.mxu0 0
  %2377 = vmatprep.subr.bf16.mxu0 0
  %2378 = vmatpush1.bf16.msra.mxu0 0
  %2379 = vmatprep.subr.bf16.mxu0 0
  %2380 = vmatpush1.bf16.msra.mxu0 0
  %2381 = vmatprep.subr.bf16.mxu0 0
  %2382 = vmatpush1.bf16.msra.mxu0 0
  %2383 = vmatprep.subr.bf16.mxu0 0
  %2384 = vmatpush1.bf16.msra.mxu0 0
  %2385 = vmatprep.subr.bf16.mxu0 0
  %2386 = vmatpush1.bf16.msra.mxu0 0
  %2387 = vmatprep.subr.bf16.mxu0 0
  %2388 = vmatpush1.bf16.msra.mxu0 0
  %2389 = vmatprep.mubr.bf16.mxu0 0
  %2390 = vmatmul.mubr.bf16.gmra.mrb[0].mxu0 %v2352
  %v2391 = vpop.f32.mrb[0].mxu0
  %v2392 = vadd.f32 0.0, %v2391
  %v2393 = vpop.f32.mrb[0].mxu0
  %v2394 = vpop.f32.mrb[0].mxu0
  %v2395 = vadd.f32 0.0, %v2394
  %v2396 = vpop.f32.mrb[0].mxu0
  %2397 = vmatprep.mubr.bf16.mxu0 0
  %2398 = vmatmul.mubr.bf16.gmra.mrb[0].mxu0 %v2355
  %v2399 = vpop.f32.mrb[0].mxu0
  %v2400 = vadd.f32 0.0, %v2399
  %v2401 = vpop.f32.mrb[0].mxu0
  %v2402 = vpop.f32.mrb[0].mxu0
  %v2403 = vadd.f32 0.0, %v2402
  %v2404 = vpop.f32.mrb[0].mxu0
  %2405 = vdwg.mxu0
  %v2410 = vunpack.c.l.b16 %v2329
  %v2411 = vunpack.c.l.b16 %v2330
  %v2412 = vunpack.c.l.b16 %v2331
  %v2413 = vunpack.c.l.b16 %v2332
  %v2414 = vpack.c.b16 %v2411, %v2410
  %v2415 = vpack.c.b16 %v2413, %v2412
  %2418 = vmatprep.subr.bf16.mxu0 0
  %2419 = vmatpush1.bf16.msra.mxu0 %v2414
  %2420 = vmatprep.subr.bf16.mxu0 0
  %2421 = vmatpush1.bf16.msra.mxu0 %v2415
  %2422 = vmatprep.subr.bf16.mxu0 0
  %2423 = vmatpush1.bf16.msra.mxu0 0
  %2424 = vmatprep.subr.bf16.mxu0 0
  %2425 = vmatpush1.bf16.msra.mxu0 0
  %2426 = vmatprep.subr.bf16.mxu0 0
  %2427 = vmatpush1.bf16.msra.mxu0 0
  %2428 = vmatprep.subr.bf16.mxu0 0
  %2429 = vmatpush1.bf16.msra.mxu0 0
  %2430 = vmatprep.subr.bf16.mxu0 0
  %2431 = vmatpush1.bf16.msra.mxu0 0
  %2432 = vmatprep.subr.bf16.mxu0 0
  %2433 = vmatpush1.bf16.msra.mxu0 0
  %2434 = vmatprep.subr.bf16.mxu0 0
  %2435 = vmatpush1.bf16.msra.mxu0 0
  %2436 = vmatprep.subr.bf16.mxu0 0
  %2437 = vmatpush1.bf16.msra.mxu0 0
  %2438 = vmatprep.subr.bf16.mxu0 0
  %2439 = vmatpush1.bf16.msra.mxu0 0
  %2440 = vmatprep.subr.bf16.mxu0 0
  %2441 = vmatpush1.bf16.msra.mxu0 0
  %2442 = vmatprep.subr.bf16.mxu0 0
  %2443 = vmatpush1.bf16.msra.mxu0 0
  %2444 = vmatprep.subr.bf16.mxu0 0
  %2445 = vmatpush1.bf16.msra.mxu0 0
  %2446 = vmatprep.subr.bf16.mxu0 0
  %2447 = vmatpush1.bf16.msra.mxu0 0
  %2448 = vmatprep.subr.bf16.mxu0 0
  %2449 = vmatpush1.bf16.msra.mxu0 0
  %2450 = vmatprep.mubr.bf16.mxu0 0
  %2451 = vmatmul.mubr.bf16.gmra.mrb[0].mxu0 %v150
  %v2452 = vpop.f32.mrb[0].mxu0
  %v2453 = vadd.f32 %v2392, %v2452
  %v2454 = vpop.f32.mrb[0].mxu0
  %v2455 = vpop.f32.mrb[0].mxu0
  %v2456 = vadd.f32 %v2395, %v2455
  %v2457 = vpop.f32.mrb[0].mxu0
  %2458 = vmatprep.mubr.bf16.mxu0 0
  %2459 = vmatmul.mubr.bf16.gmra.mrb[0].mxu0 %v153
  %v2460 = vpop.f32.mrb[0].mxu0
  %v2461 = vadd.f32 %v2400, %v2460
  %v2462 = vpop.f32.mrb[0].mxu0
  %v2463 = vpop.f32.mrb[0].mxu0
  %v2464 = vadd.f32 %v2403, %v2463
  %v2465 = vpop.f32.mrb[0].mxu0
  %2466 = vdwg.mxu0
  %v2467 = vld [vmem:[%s7] sm:$0x1]
  %v2469 = vlaneseq
  %v2470 = vshrl.u32 %v2469, 7
  %v2471 = vsub.s32 0, %v2470
  %v2472 = vrot.slane %v2467, %v2471
  %v2474 = vadd.f32 %v2453, %v2472
  %v2475 = vadd.f32 %v2456, %v2472
  %v2476 = vadd.f32 %v2461, %v2472
  %v2477 = vadd.f32 %v2464, %v2472
  %2478 = vst.msk [vmem:[%s8] sm:$0xff] %vm458, %v2474
  %2479 = vst.msk [vmem:[%s8 + $0x8] sm:$0xff] %vm458, %v2475
  %2480 = vst.msk [vmem:[%s8 + $0x10] sm:$0xff] %vm458, %v2476
  %2481 = vst.msk [vmem:[%s8 + $0x18] sm:$0xff] %vm458, %v2477
  // Predicated region
  $region34: #{tpu_custom_call.1} parent=0 // pred_check
    _
  $region35: #{tpu_custom_call.1} parent=0 // pred_check_branch
    %2483 = sbr.rel (0) target = $region37
  $region36: #{tpu_custom_call.1} parent=0 // pred_region
    _
  $region37: #{tpu_custom_call.1} parent=0 // pred_fallthru
    _
  // Predicated region
  $region38: #{tpu_custom_call.1} parent=0 // pred_check
    _
  $region39: #{tpu_custom_call.1} parent=0 // pred_check_branch
    %2485 = sbr.rel (0) target = $region41
  $region40: #{tpu_custom_call.1} parent=0 // pred_region
    _
  $region41: #{tpu_custom_call.1} parent=0 // pred_fallthru
    _

</llo_original>
